<compile_context>
chip_gen: v6e
topology: v6e:2x2x1
jax: 0.10.0
libtpu: 0.0.40
codegen_flags: <defaults>
</compile_context>

<pallas_src>
import functools

import jax
import jax.numpy as jnp
from jax import lax
from jax.experimental import pallas as pl
from jax.experimental.pallas import tpu as pltpu


def _round_up(n, m):
    return ((n + m - 1) // m) * m


# ----------------------------- Pallas kernel --------------------------------

def _fused_encoder_kernel(x_ref, wc_ref, wp_ref, wn_ref, b1_ref,
                          w2_ref, b2_ref, wl_ref, b3_ref, o_ref, *, l2):
    """Fused conv1 -> LeakyReLU -> conv2 -> LeakyReLU -> Linear for Bblk batches.

    x_ref : (M, 4C)  f32   M = Bblk*L2 rows; row (b*L2+u) = x[b, 4u:4u+4] flat
    wc_ref: (4C, 2Hp) bf16  packed conv1 taps -> [even | odd] partials
    wp_ref: (4C, Hp) bf16  conv1 tap0 applied to the previous group (even out)
    wn_ref: (4C, Hp) bf16  conv1 tap3 applied to the next group (odd out)
    w2_ref: (4, Hp, Op) bf16  conv2 taps
    wl_ref: (Op, Op) bf16  output Linear (W.T, zero-padded)
    b*_ref: (1, N)   f32   biases (zero-padded)
    o_ref : (M, Op)  f32
    """
    f32, bf16 = jnp.float32, jnp.bfloat16
    m = o_ref.shape[0]
    hp = wp_ref.shape[1]
    c4 = x_ref.shape[1]

    # Per-row group index u within each batch element -> boundary masks that
    # reproduce the Conv1d zero padding at every batch element's edges.
    row = lax.broadcasted_iota(jnp.int32, (m, 1), 0)
    u = row % l2
    first = u == 0            # group 0 of a batch element
    last = u == (l2 - 1)      # last group of a batch element

    x = x_ref[...]                               # (M, 4C) f32
    xb = x.astype(bf16)                          # cast only at the MXU feed
    zc = jnp.zeros((1, c4), f32)
    # x shifted by one group (down / up); zero rows at batch boundaries.
    x_dn = jnp.where(first, 0.0,
                     jnp.concatenate([zc, x[:-1]], axis=0)).astype(bf16)
    x_up = jnp.where(last, 0.0,
                     jnp.concatenate([x[1:], zc], axis=0)).astype(bf16)

    # ---- conv1 (k=4, s=2, p=1), even/odd outputs from one packed K=4C push --
    # he[u] = x[4u-1]@T0 + x[4u]@T1 + x[4u+1]@T2 + x[4u+2]@T3 + b1
    # ho[u] = x[4u+1]@T0 + x[4u+2]@T1 + x[4u+3]@T2 + x[4u+4]@T3 + b1
    acc = jnp.dot(xb, wc_ref[...], preferred_element_type=f32)       # (M, 2Hp)
    he = (acc[:, :hp]
          + jnp.dot(x_dn, wp_ref[...], preferred_element_type=f32)
          + b1_ref[...])
    ho = (acc[:, hp:]
          + jnp.dot(x_up, wn_ref[...], preferred_element_type=f32)
          + b1_ref[...])
    # Dropout(0.2) is identity in eval mode; LeakyReLU(0.2):
    he = jnp.where(he > 0, he, 0.2 * he)
    ho = jnp.where(ho > 0, ho, 0.2 * ho)

    # ---- conv2 (k=4, s=2, p=1) over the interleaved h1 stream --------------
    # y[v] = ho[v-1]@V0 + he[v]@V1 + ho[v]@V2 + he[v+1]@V3 + b2
    he_b = he.astype(bf16)
    ho_b = ho.astype(bf16)
    zh = jnp.zeros((1, hp), f32)
    ho_dn = jnp.where(first, 0.0,
                      jnp.concatenate([zh, ho[:-1]], axis=0)).astype(bf16)
    he_up = jnp.where(last, 0.0,
                      jnp.concatenate([he[1:], zh], axis=0)).astype(bf16)

    y = (jnp.dot(ho_dn, w2_ref[0], preferred_element_type=f32)
         + jnp.dot(he_b, w2_ref[1], preferred_element_type=f32)
         + jnp.dot(ho_b, w2_ref[2], preferred_element_type=f32)
         + jnp.dot(he_up, w2_ref[3], preferred_element_type=f32)
         + b2_ref[...])
    y = jnp.where(y > 0, y, 0.2 * y)                                  # (M, Op)

    # ---- output Linear ------------------------------------------------------
    out = jnp.dot(y.astype(bf16), wl_ref[...],
                  preferred_element_type=f32) + b3_ref[...]
    o_ref[...] = out.astype(o_ref.dtype)


# ------------------------- one-time weight preparation -----------------------

def prepare_params(params, lane=128):
    """PyTorch-layout params -> K-packed, 128-lane-padded, bf16 matmul weights."""
    w1, b1, w2, b2, w3, b3 = params
    h, c, k = w1.shape
    assert k == 4
    o = w2.shape[0]
    hp = _round_up(h, lane)
    op = _round_up(o, lane)

    def tap1(i):                         # conv1 tap i as (C, Hp)
        return jnp.pad(w1[:, :, i].T, ((0, 0), (0, hp - h)))

    t0, t1, t2, t3 = tap1(0), tap1(1), tap1(2), tap1(3)
    z = jnp.zeros((c, hp), jnp.float32)
    # Row blocks of the (4C, Hp) matrices correspond to [x[4u], x[4u+1], x[4u+2], x[4u+3]].
    w_he_cur = jnp.concatenate([t1, t2, t3, z], axis=0)    # even outputs, current group
    w_ho_cur = jnp.concatenate([z, t0, t1, t2], axis=0)    # odd outputs, current group
    w_cur = jnp.concatenate([w_he_cur, w_ho_cur], axis=1).astype(jnp.bfloat16)  # (4C, 2Hp)
    w_prev = jnp.concatenate([z, z, z, t0], axis=0).astype(jnp.bfloat16)        # prev group -> even
    w_next = jnp.concatenate([t3, z, z, z], axis=0).astype(jnp.bfloat16)        # next group -> odd

    w2s = jnp.stack([jnp.pad(w2[:, :, i].T, ((0, hp - h), (0, op - o)))
                     for i in range(4)]).astype(jnp.bfloat16)           # (4, Hp, Op)
    wl = jnp.pad(w3.T, ((0, op - o), (0, op - o))).astype(jnp.bfloat16)  # (Op, Op)

    b1p = jnp.pad(b1, (0, hp - h)).reshape(1, hp).astype(jnp.float32)
    b2p = jnp.pad(b2, (0, op - o)).reshape(1, op).astype(jnp.float32)
    b3p = jnp.pad(b3, (0, op - o)).reshape(1, op).astype(jnp.float32)
    return dict(w_cur=w_cur, w_prev=w_prev, w_next=w_next, b1=b1p,
                w2s=w2s, b2=b2p, wl=wl, b3=b3p,
                in_dim=c, hid=hp, out_pad=op, out_dim=o)


# ------------------------------ pallas_call wrapper ---------------------------

def _pick_batch_block(b, l2, target_rows=256, max_rows=4096):
    """Largest-useful batch block: grow matmul M, keep >=2 grid steps (v7x), cap VMEM."""
    divs = [d for d in range(1, b + 1) if b % d == 0]
    cands = [d for d in divs if ((d * l2) % 8 == 0 or d == b) and d * l2 <= max_rows]
    if not cands:
        cands = [b]
    multi = [d for d in cands if b // d >= 2]
    pool = multi or cands
    for d in sorted(pool):
        if d * l2 >= target_rows:
            return d
    return max(pool)


def _cost_estimate(prepped, rows, c4):
    hp, op = prepped["hid"], prepped["out_pad"]
    flops = rows * (2 * c4 * 2 * hp + 2 * (2 * c4 * hp) + 4 * (2 * hp * op) + 2 * op * op)
    w_bytes = sum(int(prepped[key].size) * prepped[key].dtype.itemsize
                  for key in ("w_cur", "w_prev", "w_next", "w2s", "wl", "b1", "b2", "b3"))
    bytes_accessed = rows * c4 * 4 + rows * op * 4 + w_bytes
    return pl.CostEstimate(flops=int(flops), transcendentals=0,
                           bytes_accessed=int(bytes_accessed))


def movement_conv_encoder(x, prepped):
    """x: (B, T, C_in) float32 -> (B, T//4, output_size) float32."""
    b, t, c = x.shape
    assert c == prepped["in_dim"]
    assert t % 4 == 0, "T must be divisible by 4 (two stride-2 convs)"
    # TODO(synk): odd/non-multiple-of-4 T would need PyTorch floor semantics.
    l2 = t // 4
    bblk = _pick_batch_block(b, l2)
    assert b % bblk == 0
    grid = (b // bblk,)

    hp, op = prepped["hid"], prepped["out_pad"]
    c4 = 4 * c
    m = bblk * l2

    # Free contiguous reshape: row (b*L2+u) = [x[b,4u], x[b,4u+1], x[b,4u+2], x[b,4u+3]].
    # No pad / bf16 cast / phase split in the wrapper anymore.
    x2d = x.reshape(b * l2, c4)

    grid_spec = pltpu.PrefetchScalarGridSpec(
        num_scalar_prefetch=0,
        grid=grid,
        in_specs=[
            pl.BlockSpec((m, c4), lambda i: (i, 0)),          # input slab (one DMA/step)
            pl.BlockSpec((c4, 2 * hp), lambda i: (0, 0)),     # conv1 packed taps (resident)
            pl.BlockSpec((c4, hp), lambda i: (0, 0)),         # conv1 prev-group tap
            pl.BlockSpec((c4, hp), lambda i: (0, 0)),         # conv1 next-group tap
            pl.BlockSpec((1, hp), lambda i: (0, 0)),          # conv1 bias
            pl.BlockSpec((4, hp, op), lambda i: (0, 0, 0)),   # conv2 taps (resident)
            pl.BlockSpec((1, op), lambda i: (0, 0)),          # conv2 bias
            pl.BlockSpec((op, op), lambda i: (0, 0)),         # linear weight (resident)
            pl.BlockSpec((1, op), lambda i: (0, 0)),          # linear bias
        ],
        out_specs=pl.BlockSpec((m, op), lambda i: (i, 0)),
    )
    out2d = pl.pallas_call(
        functools.partial(_fused_encoder_kernel, l2=l2),
        out_shape=jax.ShapeDtypeStruct((b * l2, op), jnp.float32),
        grid_spec=grid_spec,
        compiler_params=pltpu.CompilerParams(
            dimension_semantics=("parallel",),
            vmem_limit_bytes=32 * 1024 * 1024,   # <= default scoped limit on v7x
        ),
        cost_estimate=_cost_estimate(prepped, b * l2, c4),
    )(x2d, prepped["w_cur"], prepped["w_prev"], prepped["w_next"], prepped["b1"],
      prepped["w2s"], prepped["b2"], prepped["wl"], prepped["b3"])

    o = prepped["out_dim"]
    return out2d[:, :o].reshape(b, l2, o)


# ------------------------- deterministic parameters --------------------------

def _xavier_normal(key, shape, fan_in, fan_out):
    std = (2.0 / (fan_in + fan_out)) ** 0.5
    return std * jax.random.normal(key, shape, dtype=jnp.float32)


def init_params(key, input_size, hidden_size, output_size):
    k1, k2, k3 = jax.random.split(key, 3)
    # Conv1d weights: (out, in, kernel); xavier fans = in*k / out*k
    w1 = _xavier_normal(k1, (hidden_size, input_size, 4),
                        input_size * 4, hidden_size * 4)
    b1 = jnp.zeros((hidden_size,), jnp.float32)
    w2 = _xavier_normal(k2, (output_size, hidden_size, 4),
                        hidden_size * 4, output_size * 4)
    b2 = jnp.zeros((output_size,), jnp.float32)
    # Linear weight: (out, in)
    w3 = _xavier_normal(k3, (output_size, output_size),
                        output_size, output_size)
    b3 = jnp.zeros((output_size,), jnp.float32)
    return (w1, b1, w2, b2, w3, b3)


# --------------------------- pure-JAX reference ------------------------------

def _reference(x, params):
    w1, b1, w2, b2, w3, b3 = params
    xc = jnp.transpose(x, (0, 2, 1))               # (B, C, T)  NCW
    dn = ("NCH", "OIH", "NCH")

    def conv(z, w, b):
        y = lax.conv_general_dilated(z, w, window_strides=(2,),
                                     padding=[(1, 1)], dimension_numbers=dn)
        return y + b[None, :, None]

    def leaky(z):
        return jnp.where(z > 0, z, 0.2 * z)

    h = leaky(conv(xc, w1, b1))
    h = leaky(conv(h, w2, b2))
    h = jnp.transpose(h, (0, 2, 1))                # (B, T/4, O)
    return h @ w3.T + b3


# --------------------------------- main --------------------------------------

if __name__ == "__main__":
    B, T = 4, 64
    input_size, hidden_size, output_size = 8, 16, 16

    key = jax.random.PRNGKey(0)
    kx, kp = jax.random.split(key)
    x = jax.random.normal(kx, (B, T, input_size), dtype=jnp.float32)
    params = init_params(kp, input_size, hidden_size, output_size)
    prepped = prepare_params(params)

    fwd = jax.jit(lambda inp: movement_conv_encoder(inp, prepped))
    out = jax.block_until_ready(fwd(x))

    ref = _reference(x, params)
    assert out.shape == (B, T // 4, output_size), out.shape
    # bf16 MXU operands with f32 accumulation -> relaxed tolerance vs f32 reference.
    err = float(jnp.max(jnp.abs(out - ref)))
    assert err < 1e-1, err

    print("KERNEL_OK")
</pallas_src>

<mosaic_0001>
module attributes {stable_mosaic.version = 11 : i64} {
  func.func @_fused_encoder_kernel(%arg0: i32, %arg1: memref<32x32xf32, #tpu.memory_space<vmem>>, %arg2: memref<32x256xbf16, #tpu.memory_space<vmem>>, %arg3: memref<32x128xbf16, #tpu.memory_space<vmem>>, %arg4: memref<32x128xbf16, #tpu.memory_space<vmem>>, %arg5: memref<1x128xf32, #tpu.memory_space<vmem>>, %arg6: memref<4x128x128xbf16, #tpu.memory_space<vmem>>, %arg7: memref<1x128xf32, #tpu.memory_space<vmem>>, %arg8: memref<128x128xbf16, #tpu.memory_space<vmem>>, %arg9: memref<1x128xf32, #tpu.memory_space<vmem>>, %arg10: memref<32x128xf32, #tpu.memory_space<vmem>>) attributes {dimension_semantics = [#tpu.dimension_semantics<parallel>], iteration_bounds = array<i64: 2>, scalar_prefetch = 0 : i64, scratch_operands = 0 : i64, tpu.core_type = #tpu.core_type<tc>, window_params = [{transform_indices = @transform_0, window_bounds = array<i64: 32, 32>}, {pipeline_mode = #tpu.pipeline_mode<synchronous>, transform_indices = @transform_1, window_bounds = array<i64: 32, 256>}, {pipeline_mode = #tpu.pipeline_mode<synchronous>, transform_indices = @transform_2, window_bounds = array<i64: 32, 128>}, {pipeline_mode = #tpu.pipeline_mode<synchronous>, transform_indices = @transform_3, window_bounds = array<i64: 32, 128>}, {pipeline_mode = #tpu.pipeline_mode<synchronous>, transform_indices = @transform_4, window_bounds = array<i64: 1, 128>}, {pipeline_mode = #tpu.pipeline_mode<synchronous>, transform_indices = @transform_5, window_bounds = array<i64: 4, 128, 128>}, {pipeline_mode = #tpu.pipeline_mode<synchronous>, transform_indices = @transform_6, window_bounds = array<i64: 1, 128>}, {pipeline_mode = #tpu.pipeline_mode<synchronous>, transform_indices = @transform_7, window_bounds = array<i64: 128, 128>}, {pipeline_mode = #tpu.pipeline_mode<synchronous>, transform_indices = @transform_8, window_bounds = array<i64: 1, 128>}, {transform_indices = @transform_9, window_bounds = array<i64: 32, 128>}]} {
    %0 = tpu.iota {dimensions = array<i32: 0>} : vector<32x1xi32>
    %c16_i32 = arith.constant 16 : i32
    %c0_i32 = arith.constant 0 : i32
    %1 = arith.cmpi eq, %c16_i32, %c0_i32 : i32
    %c1_i32 = arith.constant 1 : i32
    %2 = arith.select %1, %c1_i32, %c16_i32 : i32
    %3 = vector.broadcast %2 : i32 to vector<32x1xi32>
    %4 = arith.remsi %0, %3 : vector<32x1xi32>
    %c0_i32_0 = arith.constant 0 : i32
    %5 = vector.broadcast %c0_i32_0 : i32 to vector<32x1xi32>
    %6 = arith.cmpi ne, %4, %5 : vector<32x1xi32>
    %c0_i32_1 = arith.constant 0 : i32
    %7 = vector.broadcast %c0_i32_1 : i32 to vector<32x1xi32>
    %8 = arith.cmpi slt, %4, %7 : vector<32x1xi32>
    %c0_i32_2 = arith.constant 0 : i32
    %9 = arith.cmpi slt, %2, %c0_i32_2 : i32
    %10 = vector.broadcast %9 : i1 to vector<32x1xi1>
    %11 = vector.broadcast %10 : vector<32x1xi1> to vector<32x1xi1>
    %12 = arith.xori %8, %11 : vector<32x1xi1>
    %13 = arith.andi %12, %6 : vector<32x1xi1>
    %14 = vector.broadcast %2 : i32 to vector<32x1xi32>
    %15 = arith.addi %4, %14 : vector<32x1xi32>
    %16 = arith.select %13, %15, %4 : vector<32x1xi1>, vector<32x1xi32>
    %c0_i32_3 = arith.constant 0 : i32
    %17 = vector.broadcast %c0_i32_3 : i32 to vector<32x1xi32>
    %18 = arith.cmpi eq, %16, %17 : vector<32x1xi32>
    %c15_i32 = arith.constant 15 : i32
    %19 = vector.broadcast %c15_i32 : i32 to vector<32x1xi32>
    %20 = arith.cmpi eq, %16, %19 : vector<32x1xi32>
    %c0 = arith.constant 0 : index
    %c0_4 = arith.constant 0 : index
    %21 = vector.load %arg1[%c0, %c0_4] : memref<32x32xf32, #tpu.memory_space<vmem>>, vector<32x32xf32>
    %22 = arith.truncf %21 : vector<32x32xf32> to vector<32x32xbf16>
    %cst = arith.constant 0.000000e+00 : f32
    %23 = vector.broadcast %cst : f32 to vector<1x32xf32>
    %24 = vector.extract_strided_slice %21 {offsets = [0, 0], sizes = [31, 32], strides = [1, 1]} : vector<32x32xf32> to vector<31x32xf32>
    %25 = tpu.concatenate %23, %24 in 0 : vector<1x32xf32>, vector<31x32xf32> -> vector<32x32xf32>
    %cst_5 = arith.constant 0.000000e+00 : f32
    %26 = vector.shape_cast %18 : vector<32x1xi1> to vector<32x1xi1>
    %27 = vector.broadcast %26 : vector<32x1xi1> to vector<32x32xi1>
    %28 = vector.broadcast %cst_5 : f32 to vector<32x32xf32>
    %29 = arith.select %27, %28, %25 : vector<32x32xi1>, vector<32x32xf32>
    %30 = arith.truncf %29 : vector<32x32xf32> to vector<32x32xbf16>
    %31 = vector.extract_strided_slice %21 {offsets = [1, 0], sizes = [31, 32], strides = [1, 1]} : vector<32x32xf32> to vector<31x32xf32>
    %32 = tpu.concatenate %31, %23 in 0 : vector<31x32xf32>, vector<1x32xf32> -> vector<32x32xf32>
    %cst_6 = arith.constant 0.000000e+00 : f32
    %33 = vector.shape_cast %20 : vector<32x1xi1> to vector<32x1xi1>
    %34 = vector.broadcast %33 : vector<32x1xi1> to vector<32x32xi1>
    %35 = vector.broadcast %cst_6 : f32 to vector<32x32xf32>
    %36 = arith.select %34, %35, %32 : vector<32x32xi1>, vector<32x32xf32>
    %37 = arith.truncf %36 : vector<32x32xf32> to vector<32x32xbf16>
    %c0_7 = arith.constant 0 : index
    %c0_8 = arith.constant 0 : index
    %38 = vector.load %arg2[%c0_7, %c0_8] : memref<32x256xbf16, #tpu.memory_space<vmem>>, vector<32x256xbf16>
    %cst_9 = arith.constant dense<0.000000e+00> : vector<32x256xf32>
    %39 = tpu.matmul %22, %38, %cst_9 {dimension_numbers = #tpu.dot_dimension_numbers<[1], [0], [0], [1], [0, 0, 1, 1], [], []>} : vector<32x32xbf16>, vector<32x256xbf16>, vector<32x256xf32> -> vector<32x256xf32>
    %40 = vector.extract_strided_slice %39 {offsets = [0, 0], sizes = [32, 128], strides = [1, 1]} : vector<32x256xf32> to vector<32x128xf32>
    %c0_10 = arith.constant 0 : index
    %c0_11 = arith.constant 0 : index
    %41 = vector.load %arg3[%c0_10, %c0_11] : memref<32x128xbf16, #tpu.memory_space<vmem>>, vector<32x128xbf16>
    %cst_12 = arith.constant dense<0.000000e+00> : vector<32x128xf32>
    %42 = tpu.matmul %30, %41, %cst_12 {dimension_numbers = #tpu.dot_dimension_numbers<[1], [0], [0], [1], [0, 0, 1, 1], [], []>} : vector<32x32xbf16>, vector<32x128xbf16>, vector<32x128xf32> -> vector<32x128xf32>
    %43 = arith.addf %40, %42 : vector<32x128xf32>
    %c0_13 = arith.constant 0 : index
    %c0_14 = arith.constant 0 : index
    %44 = vector.load %arg5[%c0_13, %c0_14] : memref<1x128xf32, #tpu.memory_space<vmem>>, vector<1x128xf32>
    %45 = vector.broadcast %44 : vector<1x128xf32> to vector<32x128xf32>
    %46 = arith.addf %43, %45 : vector<32x128xf32>
    %47 = vector.extract_strided_slice %39 {offsets = [0, 128], sizes = [32, 128], strides = [1, 1]} : vector<32x256xf32> to vector<32x128xf32>
    %c0_15 = arith.constant 0 : index
    %c0_16 = arith.constant 0 : index
    %48 = vector.load %arg4[%c0_15, %c0_16] : memref<32x128xbf16, #tpu.memory_space<vmem>>, vector<32x128xbf16>
    %cst_17 = arith.constant dense<0.000000e+00> : vector<32x128xf32>
    %49 = tpu.matmul %37, %48, %cst_17 {dimension_numbers = #tpu.dot_dimension_numbers<[1], [0], [0], [1], [0, 0, 1, 1], [], []>} : vector<32x32xbf16>, vector<32x128xbf16>, vector<32x128xf32> -> vector<32x128xf32>
    %50 = arith.addf %47, %49 : vector<32x128xf32>
    %c0_18 = arith.constant 0 : index
    %c0_19 = arith.constant 0 : index
    %51 = vector.load %arg5[%c0_18, %c0_19] : memref<1x128xf32, #tpu.memory_space<vmem>>, vector<1x128xf32>
    %52 = vector.broadcast %51 : vector<1x128xf32> to vector<32x128xf32>
    %53 = arith.addf %50, %52 : vector<32x128xf32>
    %cst_20 = arith.constant 0.000000e+00 : f32
    %54 = vector.broadcast %cst_20 : f32 to vector<32x128xf32>
    %55 = arith.cmpf ogt, %46, %54 : vector<32x128xf32>
    %cst_21 = arith.constant 2.000000e-01 : f32
    %56 = vector.broadcast %cst_21 : f32 to vector<32x128xf32>
    %57 = arith.mulf %56, %46 : vector<32x128xf32>
    %58 = arith.select %55, %46, %57 : vector<32x128xi1>, vector<32x128xf32>
    %cst_22 = arith.constant 0.000000e+00 : f32
    %59 = vector.broadcast %cst_22 : f32 to vector<32x128xf32>
    %60 = arith.cmpf ogt, %53, %59 : vector<32x128xf32>
    %cst_23 = arith.constant 2.000000e-01 : f32
    %61 = vector.broadcast %cst_23 : f32 to vector<32x128xf32>
    %62 = arith.mulf %61, %53 : vector<32x128xf32>
    %63 = arith.select %60, %53, %62 : vector<32x128xi1>, vector<32x128xf32>
    %64 = arith.truncf %58 : vector<32x128xf32> to vector<32x128xbf16>
    %65 = arith.truncf %63 : vector<32x128xf32> to vector<32x128xbf16>
    %cst_24 = arith.constant 0.000000e+00 : f32
    %66 = vector.broadcast %cst_24 : f32 to vector<1x128xf32>
    %67 = vector.extract_strided_slice %63 {offsets = [0, 0], sizes = [31, 128], strides = [1, 1]} : vector<32x128xf32> to vector<31x128xf32>
    %68 = tpu.concatenate %66, %67 in 0 : vector<1x128xf32>, vector<31x128xf32> -> vector<32x128xf32>
    %cst_25 = arith.constant 0.000000e+00 : f32
    %69 = vector.shape_cast %18 : vector<32x1xi1> to vector<32x1xi1>
    %70 = vector.broadcast %69 : vector<32x1xi1> to vector<32x128xi1>
    %71 = vector.broadcast %cst_25 : f32 to vector<32x128xf32>
    %72 = arith.select %70, %71, %68 : vector<32x128xi1>, vector<32x128xf32>
    %73 = arith.truncf %72 : vector<32x128xf32> to vector<32x128xbf16>
    %74 = vector.extract_strided_slice %58 {offsets = [1, 0], sizes = [31, 128], strides = [1, 1]} : vector<32x128xf32> to vector<31x128xf32>
    %75 = tpu.concatenate %74, %66 in 0 : vector<31x128xf32>, vector<1x128xf32> -> vector<32x128xf32>
    %cst_26 = arith.constant 0.000000e+00 : f32
    %76 = vector.shape_cast %20 : vector<32x1xi1> to vector<32x1xi1>
    %77 = vector.broadcast %76 : vector<32x1xi1> to vector<32x128xi1>
    %78 = vector.broadcast %cst_26 : f32 to vector<32x128xf32>
    %79 = arith.select %77, %78, %75 : vector<32x128xi1>, vector<32x128xf32>
    %80 = arith.truncf %79 : vector<32x128xf32> to vector<32x128xbf16>
    %c0_27 = arith.constant 0 : index
    %c0_28 = arith.constant 0 : index
    %c0_29 = arith.constant 0 : index
    %81 = vector.load %arg6[%c0_27, %c0_28, %c0_29] : memref<4x128x128xbf16, #tpu.memory_space<vmem>>, vector<1x128x128xbf16>
    %82 = vector.shape_cast %81 : vector<1x128x128xbf16> to vector<128x128xbf16>
    %cst_30 = arith.constant dense<0.000000e+00> : vector<32x128xf32>
    %83 = tpu.matmul %73, %82, %cst_30 {dimension_numbers = #tpu.dot_dimension_numbers<[1], [0], [0], [1], [0, 0, 1, 1], [], []>} : vector<32x128xbf16>, vector<128x128xbf16>, vector<32x128xf32> -> vector<32x128xf32>
    %c1 = arith.constant 1 : index
    %c0_31 = arith.constant 0 : index
    %c0_32 = arith.constant 0 : index
    %84 = vector.load %arg6[%c1, %c0_31, %c0_32] : memref<4x128x128xbf16, #tpu.memory_space<vmem>>, vector<1x128x128xbf16>
    %85 = vector.shape_cast %84 : vector<1x128x128xbf16> to vector<128x128xbf16>
    %cst_33 = arith.constant dense<0.000000e+00> : vector<32x128xf32>
    %86 = tpu.matmul %64, %85, %cst_33 {dimension_numbers = #tpu.dot_dimension_numbers<[1], [0], [0], [1], [0, 0, 1, 1], [], []>} : vector<32x128xbf16>, vector<128x128xbf16>, vector<32x128xf32> -> vector<32x128xf32>
    %87 = arith.addf %83, %86 : vector<32x128xf32>
    %c2 = arith.constant 2 : index
    %c0_34 = arith.constant 0 : index
    %c0_35 = arith.constant 0 : index
    %88 = vector.load %arg6[%c2, %c0_34, %c0_35] : memref<4x128x128xbf16, #tpu.memory_space<vmem>>, vector<1x128x128xbf16>
    %89 = vector.shape_cast %88 : vector<1x128x128xbf16> to vector<128x128xbf16>
    %cst_36 = arith.constant dense<0.000000e+00> : vector<32x128xf32>
    %90 = tpu.matmul %65, %89, %cst_36 {dimension_numbers = #tpu.dot_dimension_numbers<[1], [0], [0], [1], [0, 0, 1, 1], [], []>} : vector<32x128xbf16>, vector<128x128xbf16>, vector<32x128xf32> -> vector<32x128xf32>
    %91 = arith.addf %87, %90 : vector<32x128xf32>
    %c3 = arith.constant 3 : index
    %c0_37 = arith.constant 0 : index
    %c0_38 = arith.constant 0 : index
    %92 = vector.load %arg6[%c3, %c0_37, %c0_38] : memref<4x128x128xbf16, #tpu.memory_space<vmem>>, vector<1x128x128xbf16>
    %93 = vector.shape_cast %92 : vector<1x128x128xbf16> to vector<128x128xbf16>
    %cst_39 = arith.constant dense<0.000000e+00> : vector<32x128xf32>
    %94 = tpu.matmul %80, %93, %cst_39 {dimension_numbers = #tpu.dot_dimension_numbers<[1], [0], [0], [1], [0, 0, 1, 1], [], []>} : vector<32x128xbf16>, vector<128x128xbf16>, vector<32x128xf32> -> vector<32x128xf32>
    %95 = arith.addf %91, %94 : vector<32x128xf32>
    %c0_40 = arith.constant 0 : index
    %c0_41 = arith.constant 0 : index
    %96 = vector.load %arg7[%c0_40, %c0_41] : memref<1x128xf32, #tpu.memory_space<vmem>>, vector<1x128xf32>
    %97 = vector.broadcast %96 : vector<1x128xf32> to vector<32x128xf32>
    %98 = arith.addf %95, %97 : vector<32x128xf32>
    %cst_42 = arith.constant 0.000000e+00 : f32
    %99 = vector.broadcast %cst_42 : f32 to vector<32x128xf32>
    %100 = arith.cmpf ogt, %98, %99 : vector<32x128xf32>
    %cst_43 = arith.constant 2.000000e-01 : f32
    %101 = vector.broadcast %cst_43 : f32 to vector<32x128xf32>
    %102 = arith.mulf %101, %98 : vector<32x128xf32>
    %103 = arith.select %100, %98, %102 : vector<32x128xi1>, vector<32x128xf32>
    %104 = arith.truncf %103 : vector<32x128xf32> to vector<32x128xbf16>
    %c0_44 = arith.constant 0 : index
    %c0_45 = arith.constant 0 : index
    %105 = vector.load %arg8[%c0_44, %c0_45] : memref<128x128xbf16, #tpu.memory_space<vmem>>, vector<128x128xbf16>
    %cst_46 = arith.constant dense<0.000000e+00> : vector<32x128xf32>
    %106 = tpu.matmul %104, %105, %cst_46 {dimension_numbers = #tpu.dot_dimension_numbers<[1], [0], [0], [1], [0, 0, 1, 1], [], []>} : vector<32x128xbf16>, vector<128x128xbf16>, vector<32x128xf32> -> vector<32x128xf32>
    %c0_47 = arith.constant 0 : index
    %c0_48 = arith.constant 0 : index
    %107 = vector.load %arg9[%c0_47, %c0_48] : memref<1x128xf32, #tpu.memory_space<vmem>>, vector<1x128xf32>
    %108 = vector.broadcast %107 : vector<1x128xf32> to vector<32x128xf32>
    %109 = arith.addf %106, %108 : vector<32x128xf32>
    %c0_49 = arith.constant 0 : index
    %c0_50 = arith.constant 0 : index
    %110 = vector.load %arg10[%c0_49, %c0_50] : memref<32x128xf32, #tpu.memory_space<vmem>>, vector<32x128xf32>
    tpu.vector_store %arg10[%c0_49, %c0_50], %109 {strides = array<i32>} : memref<32x128xf32, #tpu.memory_space<vmem>>, vector<32x128xf32>,
    return
  }
  func.func @transform_0(%arg0: i32) -> (i32, i32) {
    %c0_i32 = arith.constant 0 : i32
    %c0_i32_0 = arith.constant 0 : i32
    return %arg0, %c0_i32 : i32, i32
  }
  func.func @transform_1(%arg0: i32) -> (i32, i32) {
    %c0_i32 = arith.constant 0 : i32
    %c0_i32_0 = arith.constant 0 : i32
    %c0_i32_1 = arith.constant 0 : i32
    return %c0_i32, %c0_i32_0 : i32, i32
  }
  func.func @transform_2(%arg0: i32) -> (i32, i32) {
    %c0_i32 = arith.constant 0 : i32
    %c0_i32_0 = arith.constant 0 : i32
    %c0_i32_1 = arith.constant 0 : i32
    return %c0_i32, %c0_i32_0 : i32, i32
  }
  func.func @transform_3(%arg0: i32) -> (i32, i32) {
    %c0_i32 = arith.constant 0 : i32
    %c0_i32_0 = arith.constant 0 : i32
    %c0_i32_1 = arith.constant 0 : i32
    return %c0_i32, %c0_i32_0 : i32, i32
  }
  func.func @transform_4(%arg0: i32) -> (i32, i32) {
    %c0_i32 = arith.constant 0 : i32
    %c0_i32_0 = arith.constant 0 : i32
    %c0_i32_1 = arith.constant 0 : i32
    return %c0_i32, %c0_i32_0 : i32, i32
  }
  func.func @transform_5(%arg0: i32) -> (i32, i32, i32) {
    %c0_i32 = arith.constant 0 : i32
    %c0_i32_0 = arith.constant 0 : i32
    %c0_i32_1 = arith.constant 0 : i32
    %c0_i32_2 = arith.constant 0 : i32
    return %c0_i32, %c0_i32_0, %c0_i32_1 : i32, i32, i32
  }
  func.func @transform_6(%arg0: i32) -> (i32, i32) {
    %c0_i32 = arith.constant 0 : i32
    %c0_i32_0 = arith.constant 0 : i32
    %c0_i32_1 = arith.constant 0 : i32
    return %c0_i32, %c0_i32_0 : i32, i32
  }
  func.func @transform_7(%arg0: i32) -> (i32, i32) {
    %c0_i32 = arith.constant 0 : i32
    %c0_i32_0 = arith.constant 0 : i32
    %c0_i32_1 = arith.constant 0 : i32
    return %c0_i32, %c0_i32_0 : i32, i32
  }
  func.func @transform_8(%arg0: i32) -> (i32, i32) {
    %c0_i32 = arith.constant 0 : i32
    %c0_i32_0 = arith.constant 0 : i32
    %c0_i32_1 = arith.constant 0 : i32
    return %c0_i32, %c0_i32_0 : i32, i32
  }
  func.func @transform_9(%arg0: i32) -> (i32, i32) {
    %c0_i32 = arith.constant 0 : i32
    %c0_i32_0 = arith.constant 0 : i32
    return %arg0, %c0_i32 : i32, i32
  }
}

</mosaic_0001>

<llo_original>
// kernel: _lambda_.1
$region0: #{_lambda_.1}
  #allocation0 [shape = 'u32[]', space=smem, size = 0x4, offset = 0x4, fixed_abs, tag = 'smem constant byte address 0x4 - core index']
  #allocation1 [shape = 'u32[144,128]{1,0:T(1,128)}', space=vmem, size = 0x12000, scoped, tag = 'internal scratch']
  %s0 = inlined_call_operand.vmem [shape: f32[64,32], index: 0, kind: input, shape index: {}]
  %s1 = inlined_call_operand.vmem [shape: bf16[32,256], index: 1, kind: input, shape index: {}]
  %s2 = inlined_call_operand.vmem [shape: bf16[32,128], index: 2, kind: input, shape index: {}]
  %s3 = inlined_call_operand.vmem [shape: bf16[32,128], index: 3, kind: input, shape index: {}]
  %s4 = inlined_call_operand.vmem [shape: f32[1,128], index: 4, kind: input, shape index: {}, may-alias: {4,6,8}]
  %s5 = inlined_call_operand.vmem [shape: bf16[4,128,128], index: 5, kind: input, shape index: {}]
  %s6 = inlined_call_operand.vmem [shape: f32[1,128], index: 6, kind: input, shape index: {}, may-alias: {4,6,8}]
  %s7 = inlined_call_operand.vmem [shape: bf16[128,128], index: 7, kind: input, shape index: {}]
  %s8 = inlined_call_operand.vmem [shape: f32[1,128], index: 8, kind: input, shape index: {}, may-alias: {4,6,8}]
  %s9 = inlined_call_operand.hbm [shape: f32[64,128], index: 9, kind: output, shape index: {}]
  %s10 = sld [smem:[#allocation0]]
  $region69: #{_lambda_.1} parent=0
    _
  %s12 = ssub.s32 1, %s10
  %s13 = scalar_select 0, %s12, %s10
  $region1: #{_lambda_.1} parent=0
    #allocation2 [shape = 'u8[32768]{0}', space=vmem, size = 0x8000, scoped, tag = 'output window, operand 0']
    #allocation3 [shape = 's32[2]{0}', space=sflag, size = 0x8, scoped, tag = 'scoped memory for _lambda_.1']
    %14 = vsyncpa [#allocation3], 0
    %s15 = scalar_lea.sflag [#allocation3], 1
    %16 = vsyncpa %s15, 0
    loop: start=0, step=1, limit=4
    $region2: #{_lambda_.1} parent=1 // loop_pre_header
      _
    $region3: #{_lambda_.1} parent=1 // loop_header
      %s18 = sphi 0, %s22
      %p19 = scmp.ge.s32.totalorder %s18, 4
      %s28 = sphi 0, %s30
      %s31 = sphi 0, %s28
      %s32 = sphi 0, %s31
      %s48 = sphi 0, %s32
      %s52 = sphi 0, %s52
      %s54 = sphi 0, %s52
      %s55 = sphi 0, %s54
      %s69 = sphi 0, %s55
      %s73 = sphi 0, %s73
      %s75 = sphi 0, %s73
      %s76 = sphi 0, %s75
      %s90 = sphi 0, %s76
      %s94 = sphi 0, %s94
      %s96 = sphi 0, %s94
      %s97 = sphi 0, %s96
      %s111 = sphi 0, %s97
      %s115 = sphi 0, %s115
      %s117 = sphi 0, %s115
      %s118 = sphi 0, %s117
      %s132 = sphi 0, %s118
      %s136 = sphi 0, %s136
      %s138 = sphi 0, %s136
      %s139 = sphi 0, %s138
      %s153 = sphi 0, %s139
      %s157 = sphi 0, %s157
      %s159 = sphi 0, %s157
      %s160 = sphi 0, %s159
      %s174 = sphi 0, %s160
      %s178 = sphi 0, %s178
      %s180 = sphi 0, %s178
      %s181 = sphi 0, %s180
      %s195 = sphi 0, %s181
      %s199 = sphi 0, %s199
      %s201 = sphi 0, %s199
      %s202 = sphi 0, %s201
      %s216 = sphi 0, %s202
      %s222 = sphi 0, %s224
      %s225 = sphi 0, %s222
      %s226 = sphi 0, %s225
      %s242 = sphi 0, %s226
    $region4: #{_lambda_.1} parent=1 // loop_header_branch
      %21 = sbr.rel (%p19) target = $region8
    $region5: #{_lambda_.1} parent=1 // loop_body
      %s23 = ssub.s32 %s18, 1
      %s24 = ssub.s32 %s18, 2
      %s25 = sadd.s32 %s18, 1
      %s26 = ssub.s32 %s18, %s25
      %p27 = scmp.eq.s32.totalorder %s26, 0
      %s29 = sadd.s32 %s28, 1
      %s30 = scalar_select %p27, %s28, %s29
      %p33 = pneg %p27
      %p34 = scmp.eq.s32.totalorder %s18, 1
      %p35 = por %p33, %p34
      %p36 = scmp.ne.s32.totalorder %s28, %s31
      %p37 = scmp.eq.s32.totalorder %s18, 0
      %p38 = por %p36, %p37
      %p39 = scmp.ne.s32.totalorder %s28, %s31
      %p40 = scmp.eq.s32.totalorder %s23, 1
      %p41 = por %p39, %p40
      %p42 = scmp.ne.s32.totalorder %s31, %s32
      %p43 = scmp.eq.s32.totalorder %s23, 0
      %p44 = por %p42, %p43
      %p45 = scmp.ne.s32.totalorder %s31, %s32
      %p46 = scmp.eq.s32.totalorder %s24, 1
      %p47 = por %p45, %p46
      %p49 = scmp.ne.s32.totalorder %s32, %s48
      %p50 = scmp.eq.s32.totalorder %s24, 0
      %p51 = por %p49, %p50
      %s53 = sadd.s32 %s52, 1
      %p56 = scmp.eq.s32.totalorder %s18, 1
      %p57 = scmp.ne.s32.totalorder %s52, %s54
      %p58 = scmp.eq.s32.totalorder %s18, 0
      %p59 = por %p57, %p58
      %p60 = scmp.ne.s32.totalorder %s52, %s54
      %p61 = scmp.eq.s32.totalorder %s23, 1
      %p62 = por %p60, %p61
      %p63 = scmp.ne.s32.totalorder %s54, %s55
      %p64 = scmp.eq.s32.totalorder %s23, 0
      %p65 = por %p63, %p64
      %p66 = scmp.ne.s32.totalorder %s54, %s55
      %p67 = scmp.eq.s32.totalorder %s24, 1
      %p68 = por %p66, %p67
      %p70 = scmp.ne.s32.totalorder %s55, %s69
      %p71 = scmp.eq.s32.totalorder %s24, 0
      %p72 = por %p70, %p71
      %s74 = sadd.s32 %s73, 1
      %p77 = scmp.eq.s32.totalorder %s18, 1
      %p78 = scmp.ne.s32.totalorder %s73, %s75
      %p79 = scmp.eq.s32.totalorder %s18, 0
      %p80 = por %p78, %p79
      %p81 = scmp.ne.s32.totalorder %s73, %s75
      %p82 = scmp.eq.s32.totalorder %s23, 1
      %p83 = por %p81, %p82
      %p84 = scmp.ne.s32.totalorder %s75, %s76
      %p85 = scmp.eq.s32.totalorder %s23, 0
      %p86 = por %p84, %p85
      %p87 = scmp.ne.s32.totalorder %s75, %s76
      %p88 = scmp.eq.s32.totalorder %s24, 1
      %p89 = por %p87, %p88
      %p91 = scmp.ne.s32.totalorder %s76, %s90
      %p92 = scmp.eq.s32.totalorder %s24, 0
      %p93 = por %p91, %p92
      %s95 = sadd.s32 %s94, 1
      %p98 = scmp.eq.s32.totalorder %s18, 1
      %p99 = scmp.ne.s32.totalorder %s94, %s96
      %p100 = scmp.eq.s32.totalorder %s18, 0
      %p101 = por %p99, %p100
      %p102 = scmp.ne.s32.totalorder %s94, %s96
      %p103 = scmp.eq.s32.totalorder %s23, 1
      %p104 = por %p102, %p103
      %p105 = scmp.ne.s32.totalorder %s96, %s97
      %p106 = scmp.eq.s32.totalorder %s23, 0
      %p107 = por %p105, %p106
      %p108 = scmp.ne.s32.totalorder %s96, %s97
      %p109 = scmp.eq.s32.totalorder %s24, 1
      %p110 = por %p108, %p109
      %p112 = scmp.ne.s32.totalorder %s97, %s111
      %p113 = scmp.eq.s32.totalorder %s24, 0
      %p114 = por %p112, %p113
      %s116 = sadd.s32 %s115, 1
      %p119 = scmp.eq.s32.totalorder %s18, 1
      %p120 = scmp.ne.s32.totalorder %s115, %s117
      %p121 = scmp.eq.s32.totalorder %s18, 0
      %p122 = por %p120, %p121
      %p123 = scmp.ne.s32.totalorder %s115, %s117
      %p124 = scmp.eq.s32.totalorder %s23, 1
      %p125 = por %p123, %p124
      %p126 = scmp.ne.s32.totalorder %s117, %s118
      %p127 = scmp.eq.s32.totalorder %s23, 0
      %p128 = por %p126, %p127
      %p129 = scmp.ne.s32.totalorder %s117, %s118
      %p130 = scmp.eq.s32.totalorder %s24, 1
      %p131 = por %p129, %p130
      %p133 = scmp.ne.s32.totalorder %s118, %s132
      %p134 = scmp.eq.s32.totalorder %s24, 0
      %p135 = por %p133, %p134
      %s137 = sadd.s32 %s136, 1
      %p140 = scmp.eq.s32.totalorder %s18, 1
      %p141 = scmp.ne.s32.totalorder %s136, %s138
      %p142 = scmp.eq.s32.totalorder %s18, 0
      %p143 = por %p141, %p142
      %p144 = scmp.ne.s32.totalorder %s136, %s138
      %p145 = scmp.eq.s32.totalorder %s23, 1
      %p146 = por %p144, %p145
      %p147 = scmp.ne.s32.totalorder %s138, %s139
      %p148 = scmp.eq.s32.totalorder %s23, 0
      %p149 = por %p147, %p148
      %p150 = scmp.ne.s32.totalorder %s138, %s139
      %p151 = scmp.eq.s32.totalorder %s24, 1
      %p152 = por %p150, %p151
      %p154 = scmp.ne.s32.totalorder %s139, %s153
      %p155 = scmp.eq.s32.totalorder %s24, 0
      %p156 = por %p154, %p155
      %s158 = sadd.s32 %s157, 1
      %p161 = scmp.eq.s32.totalorder %s18, 1
      %p162 = scmp.ne.s32.totalorder %s157, %s159
      %p163 = scmp.eq.s32.totalorder %s18, 0
      %p164 = por %p162, %p163
      %p165 = scmp.ne.s32.totalorder %s157, %s159
      %p166 = scmp.eq.s32.totalorder %s23, 1
      %p167 = por %p165, %p166
      %p168 = scmp.ne.s32.totalorder %s159, %s160
      %p169 = scmp.eq.s32.totalorder %s23, 0
      %p170 = por %p168, %p169
      %p171 = scmp.ne.s32.totalorder %s159, %s160
      %p172 = scmp.eq.s32.totalorder %s24, 1
      %p173 = por %p171, %p172
      %p175 = scmp.ne.s32.totalorder %s160, %s174
      %p176 = scmp.eq.s32.totalorder %s24, 0
      %p177 = por %p175, %p176
      %s179 = sadd.s32 %s178, 1
      %p182 = scmp.eq.s32.totalorder %s18, 1
      %p183 = scmp.ne.s32.totalorder %s178, %s180
      %p184 = scmp.eq.s32.totalorder %s18, 0
      %p185 = por %p183, %p184
      %p186 = scmp.ne.s32.totalorder %s178, %s180
      %p187 = scmp.eq.s32.totalorder %s23, 1
      %p188 = por %p186, %p187
      %p189 = scmp.ne.s32.totalorder %s180, %s181
      %p190 = scmp.eq.s32.totalorder %s23, 0
      %p191 = por %p189, %p190
      %p192 = scmp.ne.s32.totalorder %s180, %s181
      %p193 = scmp.eq.s32.totalorder %s24, 1
      %p194 = por %p192, %p193
      %p196 = scmp.ne.s32.totalorder %s181, %s195
      %p197 = scmp.eq.s32.totalorder %s24, 0
      %p198 = por %p196, %p197
      %s200 = sadd.s32 %s199, 1
      %p203 = scmp.eq.s32.totalorder %s18, 1
      %p204 = scmp.ne.s32.totalorder %s199, %s201
      %p205 = scmp.eq.s32.totalorder %s18, 0
      %p206 = por %p204, %p205
      %p207 = scmp.ne.s32.totalorder %s199, %s201
      %p208 = scmp.eq.s32.totalorder %s23, 1
      %p209 = por %p207, %p208
      %p210 = scmp.ne.s32.totalorder %s201, %s202
      %p211 = scmp.eq.s32.totalorder %s23, 0
      %p212 = por %p210, %p211
      %p213 = scmp.ne.s32.totalorder %s201, %s202
      %p214 = scmp.eq.s32.totalorder %s24, 1
      %p215 = por %p213, %p214
      %p217 = scmp.ne.s32.totalorder %s202, %s216
      %p218 = scmp.eq.s32.totalorder %s24, 0
      %p219 = por %p217, %p218
      %s220 = ssub.s32 %s18, %s25
      %p221 = scmp.eq.s32.totalorder %s220, 0
      %s223 = sadd.s32 %s222, 1
      %s224 = scalar_select %p221, %s222, %s223
      %p227 = pneg %p221
      %p228 = scmp.eq.s32.totalorder %s18, 1
      %p229 = por %p227, %p228
      %p230 = scmp.ne.s32.totalorder %s222, %s225
      %p231 = scmp.eq.s32.totalorder %s18, 0
      %p232 = por %p230, %p231
      %p233 = scmp.ne.s32.totalorder %s222, %s225
      %p234 = scmp.eq.s32.totalorder %s23, 1
      %p235 = por %p233, %p234
      %p236 = scmp.ne.s32.totalorder %s225, %s226
      %p237 = scmp.eq.s32.totalorder %s23, 0
      %p238 = por %p236, %p237
      %p239 = scmp.ne.s32.totalorder %s225, %s226
      %p240 = scmp.eq.s32.totalorder %s24, 1
      %p241 = por %p239, %p240
      %p243 = scmp.ne.s32.totalorder %s226, %s242
      %p244 = scmp.eq.s32.totalorder %s24, 0
      %p245 = por %p243, %p244
      %p246 = scmp.le.s32.totalorder 1, %s18
      %p247 = scmp.lt.s32.totalorder %s18, 3
      %p248 = pnand %p246, %p247
      %p249 = pneg %p248
      // Predicated region
      $region9: #{_lambda_.1} parent=5 // pred_check
        _
      $region10: #{_lambda_.1} parent=5 // pred_check_branch
        %251 = sbr.rel (%p248) target = $region12
      $region11: #{_lambda_.1} parent=5 // pred_region
        %s252 = ssub.s32 %s18, 1
        // Predicated region
        $region13: #{_lambda_.1} parent=11 // pred_check
          %p253 = pneg %p65
        $region14: #{_lambda_.1} parent=11 // pred_check_branch
          %255 = sbr.rel (%p253) target = $region16
        $region15: #{_lambda_.1} parent=11 // pred_region
          _
        $region16: #{_lambda_.1} parent=11 // pred_fallthru
          _
        // Predicated region
        $region17: #{_lambda_.1} parent=11 // pred_check
          %p256 = pneg %p86
        $region18: #{_lambda_.1} parent=11 // pred_check_branch
          %258 = sbr.rel (%p256) target = $region20
        $region19: #{_lambda_.1} parent=11 // pred_region
          _
        $region20: #{_lambda_.1} parent=11 // pred_fallthru
          _
        // Predicated region
        $region21: #{_lambda_.1} parent=11 // pred_check
          %p259 = pneg %p107
        $region22: #{_lambda_.1} parent=11 // pred_check_branch
          %261 = sbr.rel (%p259) target = $region24
        $region23: #{_lambda_.1} parent=11 // pred_region
          _
        $region24: #{_lambda_.1} parent=11 // pred_fallthru
          _
        // Predicated region
        $region25: #{_lambda_.1} parent=11 // pred_check
          %p262 = pneg %p128
        $region26: #{_lambda_.1} parent=11 // pred_check_branch
          %264 = sbr.rel (%p262) target = $region28
        $region27: #{_lambda_.1} parent=11 // pred_region
          _
        $region28: #{_lambda_.1} parent=11 // pred_fallthru
          _
        // Predicated region
        $region29: #{_lambda_.1} parent=11 // pred_check
          %p265 = pneg %p149
        $region30: #{_lambda_.1} parent=11 // pred_check_branch
          %267 = sbr.rel (%p265) target = $region32
        $region31: #{_lambda_.1} parent=11 // pred_region
          _
        $region32: #{_lambda_.1} parent=11 // pred_fallthru
          _
        // Predicated region
        $region33: #{_lambda_.1} parent=11 // pred_check
          %p268 = pneg %p170
        $region34: #{_lambda_.1} parent=11 // pred_check_branch
          %270 = sbr.rel (%p268) target = $region36
        $region35: #{_lambda_.1} parent=11 // pred_region
          _
        $region36: #{_lambda_.1} parent=11 // pred_fallthru
          _
        // Predicated region
        $region37: #{_lambda_.1} parent=11 // pred_check
          %p271 = pneg %p191
        $region38: #{_lambda_.1} parent=11 // pred_check_branch
          %273 = sbr.rel (%p271) target = $region40
        $region39: #{_lambda_.1} parent=11 // pred_region
          _
        $region40: #{_lambda_.1} parent=11 // pred_fallthru
          _
        // Predicated region
        $region41: #{_lambda_.1} parent=11 // pred_check
          %p274 = pneg %p212
        $region42: #{_lambda_.1} parent=11 // pred_check_branch
          %276 = sbr.rel (%p274) target = $region44
        $region43: #{_lambda_.1} parent=11 // pred_region
          _
        $region44: #{_lambda_.1} parent=11 // pred_fallthru
          _
      $region12: #{_lambda_.1} parent=5 // pred_fallthru
        _
      %p277 = scmp.lt.s32.totalorder %s18, 2
      // Predicated region
      $region45: #{_lambda_.1} parent=5 // pred_check
        %p278 = pneg %p277
      $region46: #{_lambda_.1} parent=5 // pred_check_branch
        %280 = sbr.rel (%p278) target = $region48
      $region47: #{_lambda_.1} parent=5 // pred_region
        // Predicated region
        $region49: #{_lambda_.1} parent=47 // pred_check
          %p281 = pneg %p38
        $region50: #{_lambda_.1} parent=47 // pred_check_branch
          %283 = sbr.rel (%p281) target = $region52
        $region51: #{_lambda_.1} parent=47 // pred_region
          %s284 = smul.u32 4, %s18
          %p285 = scmp.lt.s32.totalorder %s284, 7
          %s286 = scalar_select %p285, %s284, 7
          %s287 = smul.addr %s286, 8
          %s288 = scalar_lea.vmem %s0, %s287
          %s289 = smul.u32 4, %s18
        $region52: #{_lambda_.1} parent=47 // pred_fallthru
          _
      $region48: #{_lambda_.1} parent=5 // pred_fallthru
        _
      %p290 = scmp.le.s32.totalorder 1, %s18
      %p291 = scmp.lt.s32.totalorder %s18, 3
      %p292 = pnand %p290, %p291
      %p293 = pneg %p292
      // Predicated region
      $region53: #{_lambda_.1} parent=5 // pred_check
        _
      $region54: #{_lambda_.1} parent=5 // pred_check_branch
        %295 = sbr.rel (%p292) target = $region56
      $region55: #{_lambda_.1} parent=5 // pred_region
        %s296 = ssub.s32 %s18, 1
        %s297 = smul.u32 4, %s23
        %p298 = scmp.lt.s32.totalorder %s297, 7
        %s299 = scalar_select %p298, %s297, 7
        %s300 = smul.addr %s299, 8
        %s301 = scalar_lea.vmem %s0, %s300
        %p302 = pneg %p44
        %p303 = pneg %p41
        %p304 = pneg %p65
        %p305 = pneg %p62
        %p306 = pneg %p86
        %p307 = pneg %p83
        %p308 = pneg %p107
        %p309 = pneg %p104
        %p310 = pneg %p128
        %p311 = pneg %p125
        %p312 = pneg %p149
        %p313 = pneg %p146
        %p314 = pneg %p170
        %p315 = pneg %p167
        %p316 = pneg %p191
        %p317 = pneg %p188
        %p318 = pneg %p212
        %p319 = pneg %p209
        %p320 = pneg %p238
        %p321 = pneg %p235
        %s322 = sand.u32 %s225, 1
        %s323 = scalar_lea.sflag [#allocation3], %s322
        %s324 = sand.u32 %s225, 1
        %s325 = smul.addr %s324, 32
        %s326 = scalar_lea.vmem [#allocation2], %s325
        %s327 = smul.u32 4, %s23
        %p328 = scmp.lt.s32.totalorder %s327, 7
        %s329 = scalar_select %p328, %s327, 7
        %s330 = smul.addr %s329, 8
        %s331 = scalar_lea.vmem %s0, %s330
        %s332 = smul.u32 4, %s23
        %s333 = smul.u32 4, %s23
        %v335 = vlaneseq
        %v336 = vshrl.u32 %v335, 7
        %v337 = vadd.s32 %v336, 8
        %v338 = vadd.s32 %v336, 16
        %v339 = vadd.s32 %v336, 24
        %vm340 = vcmp.lt.s32.totalorder %v336, 0
        %v341 = vsub.s32 0, %v336
        %v342 = vsel %vm340, %v341, %v336
        %v343 = vshrl.u32 %v342, 4
        %v344 = vand.u32 %v342, 15
        %v345 = vsub.s32 0, %v344
        %v346 = vsel %vm340, %v345, %v344
        %vm347 = vcmp.lt.s32.totalorder %v337, 0
        %v348 = vsub.s32 0, %v337
        %v349 = vsel %vm347, %v348, %v337
        %v350 = vshrl.u32 %v349, 4
        %v351 = vand.u32 %v349, 15
        %v352 = vsub.s32 0, %v351
        %v353 = vsel %vm347, %v352, %v351
        %vm354 = vcmp.lt.s32.totalorder %v338, 0
        %v355 = vsub.s32 0, %v338
        %v356 = vsel %vm354, %v355, %v338
        %v357 = vshrl.u32 %v356, 4
        %v358 = vand.u32 %v356, 15
        %v359 = vsub.s32 0, %v358
        %v360 = vsel %vm354, %v359, %v358
        %vm361 = vcmp.lt.s32.totalorder %v339, 0
        %v362 = vsub.s32 0, %v339
        %v363 = vsel %vm361, %v362, %v339
        %v364 = vshrl.u32 %v363, 4
        %v365 = vand.u32 %v363, 15
        %v366 = vsub.s32 0, %v365
        %v367 = vsel %vm361, %v366, %v365
        %vm368 = vcmp.ne.s32.totalorder %v346, 0
        %vm369 = vcmp.ne.s32.totalorder %v353, 0
        %vm370 = vcmp.ne.s32.totalorder %v360, 0
        %vm371 = vcmp.ne.s32.totalorder %v367, 0
        %vm372 = vcmp.lt.s32.totalorder %v346, 0
        %vm373 = vcmp.lt.s32.totalorder %v353, 0
        %vm374 = vcmp.lt.s32.totalorder %v360, 0
        %vm375 = vcmp.lt.s32.totalorder %v367, 0
        %vm376 = vmand %vm372, %vm368
        %vm377 = vmand %vm373, %vm369
        %vm378 = vmand %vm374, %vm370
        %vm379 = vmand %vm375, %vm371
        %v380 = vadd.s32 %v346, 16
        %v381 = vadd.s32 %v353, 16
        %v382 = vadd.s32 %v360, 16
        %v383 = vadd.s32 %v367, 16
        %v384 = vsel %vm376, %v380, %v346
        %v385 = vsel %vm377, %v381, %v353
        %v386 = vsel %vm378, %v382, %v360
        %v387 = vsel %vm379, %v383, %v367
        %vm388 = vcmp.eq.s32.totalorder %v384, 0
        %vm389 = vcmp.eq.s32.totalorder %v385, 0
        %vm390 = vcmp.eq.s32.totalorder %v386, 0
        %vm391 = vcmp.eq.s32.totalorder %v387, 0
        %vm392 = vcmp.eq.s32.totalorder %v384, 15
        %vm393 = vcmp.eq.s32.totalorder %v385, 15
        %vm394 = vcmp.eq.s32.totalorder %v386, 15
        %vm395 = vcmp.eq.s32.totalorder %v387, 15
        %v396 = vld [vmem:[%s331] sm:$0xff]
        %v397 = vld [vmem:[%s331 + $0x8] sm:$0xff]
        %v398 = vld [vmem:[%s331 + $0x10] sm:$0xff]
        %v399 = vld [vmem:[%s331 + $0x18] sm:$0xff]
        %v400 = vpack.c.bf16 %v397, %v396
        %v401 = vpack.c.bf16 %v399, %v398
        %vm406 = vcmask 1040384
        %v407 = vrot.slane %v396, 7
        %v408 = vrot.slane %v397, 7
        %v409 = vsel %vm406, %v407, %v408
        %v410 = vrot.slane %v398, 7
        %v411 = vsel %vm406, %v408, %v410
        %v412 = vrot.slane %v399, 7
        %v413 = vsel %vm406, %v410, %v412
        %v418 = vsel %vm406, 0.0, %v407
        %v419 = vsel %vm388, 1, 0
        %v420 = vsel %vm389, 1, 0
        %v421 = vsel %vm390, 1, 0
        %v422 = vsel %vm391, 1, 0
        %vm423 = vcmp.eq.s32.totalorder %v419, 1
        %vm424 = vcmp.eq.s32.totalorder %v420, 1
        %vm425 = vcmp.eq.s32.totalorder %v421, 1
        %vm426 = vcmp.eq.s32.totalorder %v422, 1
        %v427 = vsel %vm423, 0.0, %v418
        %v428 = vsel %vm424, 0.0, %v409
        %v429 = vsel %vm425, 0.0, %v411
        %v430 = vsel %vm426, 0.0, %v413
        %v431 = vpack.c.bf16 %v428, %v427
        %v432 = vpack.c.bf16 %v430, %v429
        %vm433 = vcmask 1046528
        %v434 = vrot.slane %v396, 1
        %v435 = vrot.slane %v397, 1
        %v436 = vsel %vm433, %v434, %v435
        %v437 = vrot.slane %v398, 1
        %v438 = vsel %vm433, %v435, %v437
        %v439 = vrot.slane %v399, 1
        %v440 = vsel %vm433, %v437, %v439
        %v445 = vsel %vm433, %v439, 0.0
        %v446 = vsel %vm392, 1, 0
        %v447 = vsel %vm393, 1, 0
        %v448 = vsel %vm394, 1, 0
        %v449 = vsel %vm395, 1, 0
        %vm450 = vcmp.eq.s32.totalorder %v446, 1
        %vm451 = vcmp.eq.s32.totalorder %v447, 1
        %vm452 = vcmp.eq.s32.totalorder %v448, 1
        %vm453 = vcmp.eq.s32.totalorder %v449, 1
        %v454 = vsel %vm450, 0.0, %v436
        %v455 = vsel %vm451, 0.0, %v438
        %v456 = vsel %vm452, 0.0, %v440
        %v457 = vsel %vm453, 0.0, %v445
        %v458 = vpack.c.bf16 %v455, %v454
        %v459 = vpack.c.bf16 %v457, %v456
        %v460 = vld [vmem:[%s1] sm:$0xff]
        %v461 = vld [vmem:[%s1 + $0x8] sm:$0xff]
        %v462 = vld [vmem:[%s1 + $0x10] sm:$0xff]
        %v463 = vld [vmem:[%s1 + $0x18] sm:$0xff]
        %v468 = vunpack.c.l.b16 %v460
        %v469 = vunpack.c.h.b16 %v460
        %v470 = vunpack.c.l.b16 %v461
        %v471 = vunpack.c.h.b16 %v461
        %v472 = vunpack.c.l.b16 %v462
        %v473 = vunpack.c.h.b16 %v462
        %v474 = vunpack.c.l.b16 %v463
        %v475 = vunpack.c.h.b16 %v463
        %v476 = vpack.c.b16 %v470, %v468
        %v477 = vpack.c.b16 %v471, %v469
        %v478 = vpack.c.b16 %v474, %v472
        %v479 = vpack.c.b16 %v475, %v473
        %vm484 = vcmask 261120
        %v486 = vsel %vm484, %v400, 0
        %v489 = vsel %vm484, %v401, 0
        %491 = vmatprep.subr.bf16.mxu0 0
        %492 = vmatpush1.bf16.msra.mxu0 0
        %493 = vmatprep.subr.bf16.mxu0 0
        %494 = vmatpush1.bf16.msra.mxu0 0
        %495 = vmatprep.subr.bf16.mxu0 0
        %496 = vmatpush1.bf16.msra.mxu0 0
        %497 = vmatprep.subr.bf16.mxu0 0
        %498 = vmatpush1.bf16.msra.mxu0 0
        %499 = vmatprep.subr.bf16.mxu0 0
        %500 = vmatpush1.bf16.msra.mxu0 0
        %501 = vmatprep.subr.bf16.mxu0 0
        %502 = vmatpush1.bf16.msra.mxu0 0
        %503 = vmatprep.subr.bf16.mxu0 %v479
        %504 = vmatpush1.bf16.msra.mxu0 %v478
        %505 = vmatprep.subr.bf16.mxu0 %v477
        %506 = vmatpush1.bf16.msra.mxu0 %v476
        %507 = vmatprep.subr.bf16.mxu0 0
        %508 = vmatpush2.bf16.msra.mxu0 0
        %509 = vmatprep.subr.bf16.mxu0 0
        %510 = vmatpush2.bf16.msra.mxu0 0
        %511 = vmatprep.subr.bf16.mxu0 0
        %512 = vmatpush2.bf16.msra.mxu0 0
        %513 = vmatprep.subr.bf16.mxu0 0
        %514 = vmatpush2.bf16.msra.mxu0 0
        %515 = vmatprep.subr.bf16.mxu0 0
        %516 = vmatpush2.bf16.msra.mxu0 0
        %517 = vmatprep.subr.bf16.mxu0 0
        %518 = vmatpush2.bf16.msra.mxu0 0
        %519 = vmatprep.subr.bf16.mxu0 0
        %520 = vmatpush2.bf16.msra.mxu0 0
        %521 = vmatprep.subr.bf16.mxu0 0
        %522 = vmatpush2.bf16.msra.mxu0 0
        %523 = vmatprep.mubr.bf16.mxu0 0
        %524 = vmatmul.mubr.bf16.gmra.mxu0 %v486
        %v525 = vpop.f32.mrf.mxu0
        %v526 = vadd.f32 0.0, %v525
        %v527 = vpop.f32.mrf.mxu0
        %v528 = vadd.f32 0.0, %v527
        %v529 = vpop.f32.mrf.mxu0
        %v530 = vadd.f32 0.0, %v529
        %v531 = vpop.f32.mrf.mxu0
        %v532 = vadd.f32 0.0, %v531
        %533 = vmatprep.mubr.bf16.mxu0 0
        %534 = vmatmul.mubr.bf16.gmra.mxu0 %v489
        %v535 = vpop.f32.mrf.mxu0
        %v536 = vadd.f32 0.0, %v535
        %v537 = vpop.f32.mrf.mxu0
        %v538 = vadd.f32 0.0, %v537
        %v539 = vpop.f32.mrf.mxu0
        %v540 = vadd.f32 0.0, %v539
        %v541 = vpop.f32.mrf.mxu0
        %v542 = vadd.f32 0.0, %v541
        %543 = vdwg.mxu0
        %v544 = vld [vmem:[%s2] sm:$0xf]
        %v545 = vld [vmem:[%s2 + $0x4] sm:$0xf]
        %v546 = vld [vmem:[%s2 + $0x8] sm:$0xf]
        %v547 = vld [vmem:[%s2 + $0xc] sm:$0xf]
        %v552 = vunpack.c.l.b16 %v544
        %v553 = vunpack.c.l.b16 %v545
        %v554 = vunpack.c.l.b16 %v546
        %v555 = vunpack.c.l.b16 %v547
        %v556 = vpack.c.b16 %v553, %v552
        %v557 = vpack.c.b16 %v555, %v554
        %v561 = vsel %vm484, %v431, 0
        %v564 = vsel %vm484, %v432, 0
        %566 = vmatprep.subr.bf16.mxu0 0
        %567 = vmatpush1.bf16.msra.mxu0 0
        %568 = vmatprep.subr.bf16.mxu0 0
        %569 = vmatpush1.bf16.msra.mxu0 0
        %570 = vmatprep.subr.bf16.mxu0 0
        %571 = vmatpush1.bf16.msra.mxu0 0
        %572 = vmatprep.subr.bf16.mxu0 0
        %573 = vmatpush1.bf16.msra.mxu0 0
        %574 = vmatprep.subr.bf16.mxu0 0
        %575 = vmatpush1.bf16.msra.mxu0 0
        %576 = vmatprep.subr.bf16.mxu0 0
        %577 = vmatpush1.bf16.msra.mxu0 0
        %578 = vmatprep.subr.bf16.mxu0 0
        %579 = vmatpush1.bf16.msra.mxu0 %v557
        %580 = vmatprep.subr.bf16.mxu0 0
        %581 = vmatpush1.bf16.msra.mxu0 %v556
        %582 = vmatprep.subr.bf16.mxu0 0
        %583 = vmatpush2.bf16.msra.mxu0 0
        %584 = vmatprep.subr.bf16.mxu0 0
        %585 = vmatpush2.bf16.msra.mxu0 0
        %586 = vmatprep.subr.bf16.mxu0 0
        %587 = vmatpush2.bf16.msra.mxu0 0
        %588 = vmatprep.subr.bf16.mxu0 0
        %589 = vmatpush2.bf16.msra.mxu0 0
        %590 = vmatprep.subr.bf16.mxu0 0
        %591 = vmatpush2.bf16.msra.mxu0 0
        %592 = vmatprep.subr.bf16.mxu0 0
        %593 = vmatpush2.bf16.msra.mxu0 0
        %594 = vmatprep.subr.bf16.mxu0 0
        %595 = vmatpush2.bf16.msra.mxu0 0
        %596 = vmatprep.subr.bf16.mxu0 0
        %597 = vmatpush2.bf16.msra.mxu0 0
        %598 = vmatprep.mubr.bf16.mxu0 0
        %599 = vmatmul.mubr.bf16.gmra.mxu0 %v561
        %v600 = vpop.f32.mrf.mxu0
        %v601 = vadd.f32 0.0, %v600
        %v602 = vpop.f32.mrf.mxu0
        %v603 = vpop.f32.mrf.mxu0
        %v604 = vadd.f32 0.0, %v603
        %v605 = vpop.f32.mrf.mxu0
        %606 = vmatprep.mubr.bf16.mxu0 0
        %607 = vmatmul.mubr.bf16.gmra.mxu0 %v564
        %v608 = vpop.f32.mrf.mxu0
        %v609 = vadd.f32 0.0, %v608
        %v610 = vpop.f32.mrf.mxu0
        %v611 = vpop.f32.mrf.mxu0
        %v612 = vadd.f32 0.0, %v611
        %v613 = vpop.f32.mrf.mxu0
        %614 = vdwg.mxu0
        %v615 = vadd.f32 %v526, %v601
        %v616 = vadd.f32 %v530, %v604
        %v617 = vadd.f32 %v536, %v609
        %v618 = vadd.f32 %v540, %v612
        %v619 = vld [vmem:[%s4] sm:$0x1]
        %v621 = vlaneseq
        %v622 = vshrl.u32 %v621, 7
        %v623 = vsub.s32 0, %v622
        %v624 = vrot.slane %v619, %v623
        %v626 = vadd.f32 %v615, %v624
        %v627 = vadd.f32 %v616, %v624
        %v628 = vadd.f32 %v617, %v624
        %v629 = vadd.f32 %v618, %v624
        %v630 = vld [vmem:[%s3] sm:$0xf]
        %v631 = vld [vmem:[%s3 + $0x4] sm:$0xf]
        %v632 = vld [vmem:[%s3 + $0x8] sm:$0xf]
        %v633 = vld [vmem:[%s3 + $0xc] sm:$0xf]
        %v638 = vunpack.c.l.b16 %v630
        %v639 = vunpack.c.l.b16 %v631
        %v640 = vunpack.c.l.b16 %v632
        %v641 = vunpack.c.l.b16 %v633
        %v642 = vpack.c.b16 %v639, %v638
        %v643 = vpack.c.b16 %v641, %v640
        %v647 = vsel %vm484, %v458, 0
        %v650 = vsel %vm484, %v459, 0
        %652 = vmatprep.subr.bf16.mxu0 0
        %653 = vmatpush1.bf16.msra.mxu0 0
        %654 = vmatprep.subr.bf16.mxu0 0
        %655 = vmatpush1.bf16.msra.mxu0 0
        %656 = vmatprep.subr.bf16.mxu0 0
        %657 = vmatpush1.bf16.msra.mxu0 0
        %658 = vmatprep.subr.bf16.mxu0 0
        %659 = vmatpush1.bf16.msra.mxu0 0
        %660 = vmatprep.subr.bf16.mxu0 0
        %661 = vmatpush1.bf16.msra.mxu0 0
        %662 = vmatprep.subr.bf16.mxu0 0
        %663 = vmatpush1.bf16.msra.mxu0 0
        %664 = vmatprep.subr.bf16.mxu0 0
        %665 = vmatpush1.bf16.msra.mxu0 %v643
        %666 = vmatprep.subr.bf16.mxu0 0
        %667 = vmatpush1.bf16.msra.mxu0 %v642
        %668 = vmatprep.subr.bf16.mxu0 0
        %669 = vmatpush2.bf16.msra.mxu0 0
        %670 = vmatprep.subr.bf16.mxu0 0
        %671 = vmatpush2.bf16.msra.mxu0 0
        %672 = vmatprep.subr.bf16.mxu0 0
        %673 = vmatpush2.bf16.msra.mxu0 0
        %674 = vmatprep.subr.bf16.mxu0 0
        %675 = vmatpush2.bf16.msra.mxu0 0
        %676 = vmatprep.subr.bf16.mxu0 0
        %677 = vmatpush2.bf16.msra.mxu0 0
        %678 = vmatprep.subr.bf16.mxu0 0
        %679 = vmatpush2.bf16.msra.mxu0 0
        %680 = vmatprep.subr.bf16.mxu0 0
        %681 = vmatpush2.bf16.msra.mxu0 0
        %682 = vmatprep.subr.bf16.mxu0 0
        %683 = vmatpush2.bf16.msra.mxu0 0
        %684 = vmatprep.mubr.bf16.mxu0 0
        %685 = vmatmul.mubr.bf16.gmra.mxu0 %v647
        %v686 = vpop.f32.mrf.mxu0
        %v687 = vadd.f32 0.0, %v686
        %v688 = vpop.f32.mrf.mxu0
        %v689 = vpop.f32.mrf.mxu0
        %v690 = vadd.f32 0.0, %v689
        %v691 = vpop.f32.mrf.mxu0
        %692 = vmatprep.mubr.bf16.mxu0 0
        %693 = vmatmul.mubr.bf16.gmra.mxu0 %v650
        %v694 = vpop.f32.mrf.mxu0
        %v695 = vadd.f32 0.0, %v694
        %v696 = vpop.f32.mrf.mxu0
        %v697 = vpop.f32.mrf.mxu0
        %v698 = vadd.f32 0.0, %v697
        %v699 = vpop.f32.mrf.mxu0
        %700 = vdwg.mxu0
        %v701 = vadd.f32 %v528, %v687
        %v702 = vadd.f32 %v532, %v690
        %v703 = vadd.f32 %v538, %v695
        %v704 = vadd.f32 %v542, %v698
        %v705 = vadd.f32 %v701, %v624
        %v706 = vadd.f32 %v702, %v624
        %v707 = vadd.f32 %v703, %v624
        %v708 = vadd.f32 %v704, %v624
        %vm709 = vcmp.gt.f32.partialorder %v626, 0.0
        %vm710 = vcmp.gt.f32.partialorder %v627, 0.0
        %vm711 = vcmp.gt.f32.partialorder %v628, 0.0
        %vm712 = vcmp.gt.f32.partialorder %v629, 0.0
        %v713 = vmul.f32 %v626, 0.2
        %v714 = vmul.f32 %v627, 0.2
        %v715 = vmul.f32 %v628, 0.2
        %v716 = vmul.f32 %v629, 0.2
        %v717 = vsel %vm709, %v626, %v713
        %v718 = vsel %vm710, %v627, %v714
        %v719 = vsel %vm711, %v628, %v715
        %v720 = vsel %vm712, %v629, %v716
        %vm721 = vcmp.gt.f32.partialorder %v705, 0.0
        %vm722 = vcmp.gt.f32.partialorder %v706, 0.0
        %vm723 = vcmp.gt.f32.partialorder %v707, 0.0
        %vm724 = vcmp.gt.f32.partialorder %v708, 0.0
        %v725 = vmul.f32 %v705, 0.2
        %v726 = vmul.f32 %v706, 0.2
        %v727 = vmul.f32 %v707, 0.2
        %v728 = vmul.f32 %v708, 0.2
        %v729 = vsel %vm721, %v705, %v725
        %v730 = vsel %vm722, %v706, %v726
        %v731 = vsel %vm723, %v707, %v727
        %v732 = vsel %vm724, %v708, %v728
        %v733 = vpack.c.bf16 %v718, %v717
        %v734 = vpack.c.bf16 %v720, %v719
        %v735 = vpack.c.bf16 %v730, %v729
        %v736 = vpack.c.bf16 %v732, %v731
        %v741 = vrot.slane %v729, 7
        %v742 = vrot.slane %v730, 7
        %v743 = vsel %vm406, %v741, %v742
        %v744 = vrot.slane %v731, 7
        %v745 = vsel %vm406, %v742, %v744
        %v746 = vrot.slane %v732, 7
        %v747 = vsel %vm406, %v744, %v746
        %v752 = vsel %vm406, 0.0, %v741
        %v753 = vsel %vm423, 0.0, %v752
        %v754 = vsel %vm424, 0.0, %v743
        %v755 = vsel %vm425, 0.0, %v745
        %v756 = vsel %vm426, 0.0, %v747
        %v757 = vpack.c.bf16 %v754, %v753
        %v758 = vpack.c.bf16 %v756, %v755
        %v763 = vrot.slane %v717, 1
        %v764 = vrot.slane %v718, 1
        %v765 = vsel %vm433, %v763, %v764
        %v766 = vrot.slane %v719, 1
        %v767 = vsel %vm433, %v764, %v766
        %v768 = vrot.slane %v720, 1
        %v769 = vsel %vm433, %v766, %v768
        %v774 = vsel %vm433, %v768, 0.0
        %v775 = vsel %vm450, 0.0, %v765
        %v776 = vsel %vm451, 0.0, %v767
        %v777 = vsel %vm452, 0.0, %v769
        %v778 = vsel %vm453, 0.0, %v774
        %v779 = vpack.c.bf16 %v776, %v775
        %v780 = vpack.c.bf16 %v778, %v777
        %v781 = vld [vmem:[%s5] sm:$0xf]
        %v782 = vld [vmem:[%s5 + $0x4] sm:$0xf]
        %v783 = vld [vmem:[%s5 + $0x8] sm:$0xf]
        %v784 = vld [vmem:[%s5 + $0xc] sm:$0xf]
        %v785 = vld [vmem:[%s5 + $0x10] sm:$0xf]
        %v786 = vld [vmem:[%s5 + $0x14] sm:$0xf]
        %v787 = vld [vmem:[%s5 + $0x18] sm:$0xf]
        %v788 = vld [vmem:[%s5 + $0x1c] sm:$0xf]
        %v789 = vld [vmem:[%s5 + $0x20] sm:$0xf]
        %v790 = vld [vmem:[%s5 + $0x24] sm:$0xf]
        %v791 = vld [vmem:[%s5 + $0x28] sm:$0xf]
        %v792 = vld [vmem:[%s5 + $0x2c] sm:$0xf]
        %v793 = vld [vmem:[%s5 + $0x30] sm:$0xf]
        %v794 = vld [vmem:[%s5 + $0x34] sm:$0xf]
        %v795 = vld [vmem:[%s5 + $0x38] sm:$0xf]
        %v796 = vld [vmem:[%s5 + $0x3c] sm:$0xf]
        %s797 = scalar_lea.vmem %s5, 64
        %v798 = vld [vmem:[%s797] sm:$0xf]
        %v799 = vld [vmem:[%s797 + $0x4] sm:$0xf]
        %v800 = vld [vmem:[%s797 + $0x8] sm:$0xf]
        %v801 = vld [vmem:[%s797 + $0xc] sm:$0xf]
        %v802 = vld [vmem:[%s797 + $0x10] sm:$0xf]
        %v803 = vld [vmem:[%s797 + $0x14] sm:$0xf]
        %v804 = vld [vmem:[%s797 + $0x18] sm:$0xf]
        %v805 = vld [vmem:[%s797 + $0x1c] sm:$0xf]
        %v806 = vld [vmem:[%s797 + $0x20] sm:$0xf]
        %v807 = vld [vmem:[%s797 + $0x24] sm:$0xf]
        %v808 = vld [vmem:[%s797 + $0x28] sm:$0xf]
        %v809 = vld [vmem:[%s797 + $0x2c] sm:$0xf]
        %v810 = vld [vmem:[%s797 + $0x30] sm:$0xf]
        %v811 = vld [vmem:[%s797 + $0x34] sm:$0xf]
        %v812 = vld [vmem:[%s797 + $0x38] sm:$0xf]
        %v813 = vld [vmem:[%s797 + $0x3c] sm:$0xf]
        %v830 = vunpack.c.l.b16 %v798
        %v831 = vunpack.c.l.b16 %v799
        %v832 = vunpack.c.l.b16 %v800
        %v833 = vunpack.c.l.b16 %v801
        %v834 = vunpack.c.l.b16 %v802
        %v835 = vunpack.c.l.b16 %v803
        %v836 = vunpack.c.l.b16 %v804
        %v837 = vunpack.c.l.b16 %v805
        %v838 = vunpack.c.l.b16 %v806
        %v839 = vunpack.c.l.b16 %v807
        %v840 = vunpack.c.l.b16 %v808
        %v841 = vunpack.c.l.b16 %v809
        %v842 = vunpack.c.l.b16 %v810
        %v843 = vunpack.c.l.b16 %v811
        %v844 = vunpack.c.l.b16 %v812
        %v845 = vunpack.c.l.b16 %v813
        %v846 = vpack.c.b16 %v831, %v830
        %v847 = vpack.c.b16 %v833, %v832
        %v848 = vpack.c.b16 %v835, %v834
        %v849 = vpack.c.b16 %v837, %v836
        %v850 = vpack.c.b16 %v839, %v838
        %v851 = vpack.c.b16 %v841, %v840
        %v852 = vpack.c.b16 %v843, %v842
        %v853 = vpack.c.b16 %v845, %v844
        %862 = vmatprep.subr.bf16.mxu0 0
        %863 = vmatpush1.bf16.msra.mxu0 %v853
        %864 = vmatprep.subr.bf16.mxu0 0
        %865 = vmatpush1.bf16.msra.mxu0 %v852
        %866 = vmatprep.subr.bf16.mxu0 0
        %867 = vmatpush1.bf16.msra.mxu0 %v851
        %868 = vmatprep.subr.bf16.mxu0 0
        %869 = vmatpush1.bf16.msra.mxu0 %v850
        %870 = vmatprep.subr.bf16.mxu0 0
        %871 = vmatpush1.bf16.msra.mxu0 %v849
        %872 = vmatprep.subr.bf16.mxu0 0
        %873 = vmatpush1.bf16.msra.mxu0 %v848
        %874 = vmatprep.subr.bf16.mxu0 0
        %875 = vmatpush1.bf16.msra.mxu0 %v847
        %876 = vmatprep.subr.bf16.mxu0 0
        %877 = vmatpush1.bf16.msra.mxu0 %v846
        %878 = vmatprep.subr.bf16.mxu0 0
        %879 = vmatpush2.bf16.msra.mxu0 0
        %880 = vmatprep.subr.bf16.mxu0 0
        %881 = vmatpush2.bf16.msra.mxu0 0
        %882 = vmatprep.subr.bf16.mxu0 0
        %883 = vmatpush2.bf16.msra.mxu0 0
        %884 = vmatprep.subr.bf16.mxu0 0
        %885 = vmatpush2.bf16.msra.mxu0 0
        %886 = vmatprep.subr.bf16.mxu0 0
        %887 = vmatpush2.bf16.msra.mxu0 0
        %888 = vmatprep.subr.bf16.mxu0 0
        %889 = vmatpush2.bf16.msra.mxu0 0
        %890 = vmatprep.subr.bf16.mxu0 0
        %891 = vmatpush2.bf16.msra.mxu0 0
        %892 = vmatprep.subr.bf16.mxu0 0
        %893 = vmatpush2.bf16.msra.mxu0 0
        %894 = vmatprep.mubr.bf16.mxu0 0
        %895 = vmatmul.mubr.bf16.gmra.mxu0 %v733
        %v896 = vpop.f32.mrf.mxu0
        %v897 = vadd.f32 0.0, %v896
        %v898 = vpop.f32.mrf.mxu0
        %v899 = vpop.f32.mrf.mxu0
        %v900 = vadd.f32 0.0, %v899
        %v901 = vpop.f32.mrf.mxu0
        %902 = vmatprep.mubr.bf16.mxu0 0
        %903 = vmatmul.mubr.bf16.gmra.mxu0 %v734
        %v904 = vpop.f32.mrf.mxu0
        %v905 = vadd.f32 0.0, %v904
        %v906 = vpop.f32.mrf.mxu0
        %v907 = vpop.f32.mrf.mxu0
        %v908 = vadd.f32 0.0, %v907
        %v909 = vpop.f32.mrf.mxu0
        %910 = vdwg.mxu0
        %v927 = vunpack.c.l.b16 %v781
        %v928 = vunpack.c.l.b16 %v782
        %v929 = vunpack.c.l.b16 %v783
        %v930 = vunpack.c.l.b16 %v784
        %v931 = vunpack.c.l.b16 %v785
        %v932 = vunpack.c.l.b16 %v786
        %v933 = vunpack.c.l.b16 %v787
        %v934 = vunpack.c.l.b16 %v788
        %v935 = vunpack.c.l.b16 %v789
        %v936 = vunpack.c.l.b16 %v790
        %v937 = vunpack.c.l.b16 %v791
        %v938 = vunpack.c.l.b16 %v792
        %v939 = vunpack.c.l.b16 %v793
        %v940 = vunpack.c.l.b16 %v794
        %v941 = vunpack.c.l.b16 %v795
        %v942 = vunpack.c.l.b16 %v796
        %v943 = vpack.c.b16 %v928, %v927
        %v944 = vpack.c.b16 %v930, %v929
        %v945 = vpack.c.b16 %v932, %v931
        %v946 = vpack.c.b16 %v934, %v933
        %v947 = vpack.c.b16 %v936, %v935
        %v948 = vpack.c.b16 %v938, %v937
        %v949 = vpack.c.b16 %v940, %v939
        %v950 = vpack.c.b16 %v942, %v941
        %959 = vmatprep.subr.bf16.mxu0 0
        %960 = vmatpush1.bf16.msra.mxu0 %v950
        %961 = vmatprep.subr.bf16.mxu0 0
        %962 = vmatpush1.bf16.msra.mxu0 %v949
        %963 = vmatprep.subr.bf16.mxu0 0
        %964 = vmatpush1.bf16.msra.mxu0 %v948
        %965 = vmatprep.subr.bf16.mxu0 0
        %966 = vmatpush1.bf16.msra.mxu0 %v947
        %967 = vmatprep.subr.bf16.mxu0 0
        %968 = vmatpush1.bf16.msra.mxu0 %v946
        %969 = vmatprep.subr.bf16.mxu0 0
        %970 = vmatpush1.bf16.msra.mxu0 %v945
        %971 = vmatprep.subr.bf16.mxu0 0
        %972 = vmatpush1.bf16.msra.mxu0 %v944
        %973 = vmatprep.subr.bf16.mxu0 0
        %974 = vmatpush1.bf16.msra.mxu0 %v943
        %975 = vmatprep.subr.bf16.mxu0 0
        %976 = vmatpush2.bf16.msra.mxu0 0
        %977 = vmatprep.subr.bf16.mxu0 0
        %978 = vmatpush2.bf16.msra.mxu0 0
        %979 = vmatprep.subr.bf16.mxu0 0
        %980 = vmatpush2.bf16.msra.mxu0 0
        %981 = vmatprep.subr.bf16.mxu0 0
        %982 = vmatpush2.bf16.msra.mxu0 0
        %983 = vmatprep.subr.bf16.mxu0 0
        %984 = vmatpush2.bf16.msra.mxu0 0
        %985 = vmatprep.subr.bf16.mxu0 0
        %986 = vmatpush2.bf16.msra.mxu0 0
        %987 = vmatprep.subr.bf16.mxu0 0
        %988 = vmatpush2.bf16.msra.mxu0 0
        %989 = vmatprep.subr.bf16.mxu0 0
        %990 = vmatpush2.bf16.msra.mxu0 0
        %991 = vmatprep.mubr.bf16.mxu0 0
        %992 = vmatmul.mubr.bf16.gmra.mxu0 %v757
        %v993 = vpop.f32.mrf.mxu0
        %v994 = vadd.f32 %v897, %v993
        %v995 = vpop.f32.mrf.mxu0
        %v996 = vpop.f32.mrf.mxu0
        %v997 = vadd.f32 %v900, %v996
        %v998 = vpop.f32.mrf.mxu0
        %999 = vmatprep.mubr.bf16.mxu0 0
        %1000 = vmatmul.mubr.bf16.gmra.mxu0 %v758
        %v1001 = vpop.f32.mrf.mxu0
        %v1002 = vadd.f32 %v905, %v1001
        %v1003 = vpop.f32.mrf.mxu0
        %v1004 = vpop.f32.mrf.mxu0
        %v1005 = vadd.f32 %v908, %v1004
        %v1006 = vpop.f32.mrf.mxu0
        %1007 = vdwg.mxu0
        %s1008 = scalar_lea.vmem %s5, 128
        %v1009 = vld [vmem:[%s1008] sm:$0xf]
        %v1010 = vld [vmem:[%s1008 + $0x4] sm:$0xf]
        %v1011 = vld [vmem:[%s1008 + $0x8] sm:$0xf]
        %v1012 = vld [vmem:[%s1008 + $0xc] sm:$0xf]
        %v1013 = vld [vmem:[%s1008 + $0x10] sm:$0xf]
        %v1014 = vld [vmem:[%s1008 + $0x14] sm:$0xf]
        %v1015 = vld [vmem:[%s1008 + $0x18] sm:$0xf]
        %v1016 = vld [vmem:[%s1008 + $0x1c] sm:$0xf]
        %v1017 = vld [vmem:[%s1008 + $0x20] sm:$0xf]
        %v1018 = vld [vmem:[%s1008 + $0x24] sm:$0xf]
        %v1019 = vld [vmem:[%s1008 + $0x28] sm:$0xf]
        %v1020 = vld [vmem:[%s1008 + $0x2c] sm:$0xf]
        %v1021 = vld [vmem:[%s1008 + $0x30] sm:$0xf]
        %v1022 = vld [vmem:[%s1008 + $0x34] sm:$0xf]
        %v1023 = vld [vmem:[%s1008 + $0x38] sm:$0xf]
        %v1024 = vld [vmem:[%s1008 + $0x3c] sm:$0xf]
        %v1041 = vunpack.c.l.b16 %v1009
        %v1042 = vunpack.c.l.b16 %v1010
        %v1043 = vunpack.c.l.b16 %v1011
        %v1044 = vunpack.c.l.b16 %v1012
        %v1045 = vunpack.c.l.b16 %v1013
        %v1046 = vunpack.c.l.b16 %v1014
        %v1047 = vunpack.c.l.b16 %v1015
        %v1048 = vunpack.c.l.b16 %v1016
        %v1049 = vunpack.c.l.b16 %v1017
        %v1050 = vunpack.c.l.b16 %v1018
        %v1051 = vunpack.c.l.b16 %v1019
        %v1052 = vunpack.c.l.b16 %v1020
        %v1053 = vunpack.c.l.b16 %v1021
        %v1054 = vunpack.c.l.b16 %v1022
        %v1055 = vunpack.c.l.b16 %v1023
        %v1056 = vunpack.c.l.b16 %v1024
        %v1057 = vpack.c.b16 %v1042, %v1041
        %v1058 = vpack.c.b16 %v1044, %v1043
        %v1059 = vpack.c.b16 %v1046, %v1045
        %v1060 = vpack.c.b16 %v1048, %v1047
        %v1061 = vpack.c.b16 %v1050, %v1049
        %v1062 = vpack.c.b16 %v1052, %v1051
        %v1063 = vpack.c.b16 %v1054, %v1053
        %v1064 = vpack.c.b16 %v1056, %v1055
        %1073 = vmatprep.subr.bf16.mxu0 0
        %1074 = vmatpush1.bf16.msra.mxu0 %v1064
        %1075 = vmatprep.subr.bf16.mxu0 0
        %1076 = vmatpush1.bf16.msra.mxu0 %v1063
        %1077 = vmatprep.subr.bf16.mxu0 0
        %1078 = vmatpush1.bf16.msra.mxu0 %v1062
        %1079 = vmatprep.subr.bf16.mxu0 0
        %1080 = vmatpush1.bf16.msra.mxu0 %v1061
        %1081 = vmatprep.subr.bf16.mxu0 0
        %1082 = vmatpush1.bf16.msra.mxu0 %v1060
        %1083 = vmatprep.subr.bf16.mxu0 0
        %1084 = vmatpush1.bf16.msra.mxu0 %v1059
        %1085 = vmatprep.subr.bf16.mxu0 0
        %1086 = vmatpush1.bf16.msra.mxu0 %v1058
        %1087 = vmatprep.subr.bf16.mxu0 0
        %1088 = vmatpush1.bf16.msra.mxu0 %v1057
        %1089 = vmatprep.subr.bf16.mxu0 0
        %1090 = vmatpush2.bf16.msra.mxu0 0
        %1091 = vmatprep.subr.bf16.mxu0 0
        %1092 = vmatpush2.bf16.msra.mxu0 0
        %1093 = vmatprep.subr.bf16.mxu0 0
        %1094 = vmatpush2.bf16.msra.mxu0 0
        %1095 = vmatprep.subr.bf16.mxu0 0
        %1096 = vmatpush2.bf16.msra.mxu0 0
        %1097 = vmatprep.subr.bf16.mxu0 0
        %1098 = vmatpush2.bf16.msra.mxu0 0
        %1099 = vmatprep.subr.bf16.mxu0 0
        %1100 = vmatpush2.bf16.msra.mxu0 0
        %1101 = vmatprep.subr.bf16.mxu0 0
        %1102 = vmatpush2.bf16.msra.mxu0 0
        %1103 = vmatprep.subr.bf16.mxu0 0
        %1104 = vmatpush2.bf16.msra.mxu0 0
        %1105 = vmatprep.mubr.bf16.mxu0 0
        %1106 = vmatmul.mubr.bf16.gmra.mxu0 %v735
        %v1107 = vpop.f32.mrf.mxu0
        %v1108 = vadd.f32 0.0, %v1107
        %v1109 = vpop.f32.mrf.mxu0
        %v1110 = vpop.f32.mrf.mxu0
        %v1111 = vadd.f32 0.0, %v1110
        %v1112 = vpop.f32.mrf.mxu0
        %1113 = vmatprep.mubr.bf16.mxu0 0
        %1114 = vmatmul.mubr.bf16.gmra.mxu0 %v736
        %v1115 = vpop.f32.mrf.mxu0
        %v1116 = vadd.f32 0.0, %v1115
        %v1117 = vpop.f32.mrf.mxu0
        %v1118 = vpop.f32.mrf.mxu0
        %v1119 = vadd.f32 0.0, %v1118
        %v1120 = vpop.f32.mrf.mxu0
        %1121 = vdwg.mxu0
        %v1122 = vadd.f32 %v994, %v1108
        %v1123 = vadd.f32 %v997, %v1111
        %v1124 = vadd.f32 %v1002, %v1116
        %v1125 = vadd.f32 %v1005, %v1119
        %s1126 = scalar_lea.vmem %s5, 192
        %v1127 = vld [vmem:[%s1126] sm:$0xf]
        %v1128 = vld [vmem:[%s1126 + $0x4] sm:$0xf]
        %v1129 = vld [vmem:[%s1126 + $0x8] sm:$0xf]
        %v1130 = vld [vmem:[%s1126 + $0xc] sm:$0xf]
        %v1131 = vld [vmem:[%s1126 + $0x10] sm:$0xf]
        %v1132 = vld [vmem:[%s1126 + $0x14] sm:$0xf]
        %v1133 = vld [vmem:[%s1126 + $0x18] sm:$0xf]
        %v1134 = vld [vmem:[%s1126 + $0x1c] sm:$0xf]
        %v1135 = vld [vmem:[%s1126 + $0x20] sm:$0xf]
        %v1136 = vld [vmem:[%s1126 + $0x24] sm:$0xf]
        %v1137 = vld [vmem:[%s1126 + $0x28] sm:$0xf]
        %v1138 = vld [vmem:[%s1126 + $0x2c] sm:$0xf]
        %v1139 = vld [vmem:[%s1126 + $0x30] sm:$0xf]
        %v1140 = vld [vmem:[%s1126 + $0x34] sm:$0xf]
        %v1141 = vld [vmem:[%s1126 + $0x38] sm:$0xf]
        %v1142 = vld [vmem:[%s1126 + $0x3c] sm:$0xf]
        %v1159 = vunpack.c.l.b16 %v1127
        %v1160 = vunpack.c.l.b16 %v1128
        %v1161 = vunpack.c.l.b16 %v1129
        %v1162 = vunpack.c.l.b16 %v1130
        %v1163 = vunpack.c.l.b16 %v1131
        %v1164 = vunpack.c.l.b16 %v1132
        %v1165 = vunpack.c.l.b16 %v1133
        %v1166 = vunpack.c.l.b16 %v1134
        %v1167 = vunpack.c.l.b16 %v1135
        %v1168 = vunpack.c.l.b16 %v1136
        %v1169 = vunpack.c.l.b16 %v1137
        %v1170 = vunpack.c.l.b16 %v1138
        %v1171 = vunpack.c.l.b16 %v1139
        %v1172 = vunpack.c.l.b16 %v1140
        %v1173 = vunpack.c.l.b16 %v1141
        %v1174 = vunpack.c.l.b16 %v1142
        %v1175 = vpack.c.b16 %v1160, %v1159
        %v1176 = vpack.c.b16 %v1162, %v1161
        %v1177 = vpack.c.b16 %v1164, %v1163
        %v1178 = vpack.c.b16 %v1166, %v1165
        %v1179 = vpack.c.b16 %v1168, %v1167
        %v1180 = vpack.c.b16 %v1170, %v1169
        %v1181 = vpack.c.b16 %v1172, %v1171
        %v1182 = vpack.c.b16 %v1174, %v1173
        %1191 = vmatprep.subr.bf16.mxu0 0
        %1192 = vmatpush1.bf16.msra.mxu0 %v1182
        %1193 = vmatprep.subr.bf16.mxu0 0
        %1194 = vmatpush1.bf16.msra.mxu0 %v1181
        %1195 = vmatprep.subr.bf16.mxu0 0
        %1196 = vmatpush1.bf16.msra.mxu0 %v1180
        %1197 = vmatprep.subr.bf16.mxu0 0
        %1198 = vmatpush1.bf16.msra.mxu0 %v1179
        %1199 = vmatprep.subr.bf16.mxu0 0
        %1200 = vmatpush1.bf16.msra.mxu0 %v1178
        %1201 = vmatprep.subr.bf16.mxu0 0
        %1202 = vmatpush1.bf16.msra.mxu0 %v1177
        %1203 = vmatprep.subr.bf16.mxu0 0
        %1204 = vmatpush1.bf16.msra.mxu0 %v1176
        %1205 = vmatprep.subr.bf16.mxu0 0
        %1206 = vmatpush1.bf16.msra.mxu0 %v1175
        %1207 = vmatprep.subr.bf16.mxu0 0
        %1208 = vmatpush2.bf16.msra.mxu0 0
        %1209 = vmatprep.subr.bf16.mxu0 0
        %1210 = vmatpush2.bf16.msra.mxu0 0
        %1211 = vmatprep.subr.bf16.mxu0 0
        %1212 = vmatpush2.bf16.msra.mxu0 0
        %1213 = vmatprep.subr.bf16.mxu0 0
        %1214 = vmatpush2.bf16.msra.mxu0 0
        %1215 = vmatprep.subr.bf16.mxu0 0
        %1216 = vmatpush2.bf16.msra.mxu0 0
        %1217 = vmatprep.subr.bf16.mxu0 0
        %1218 = vmatpush2.bf16.msra.mxu0 0
        %1219 = vmatprep.subr.bf16.mxu0 0
        %1220 = vmatpush2.bf16.msra.mxu0 0
        %1221 = vmatprep.subr.bf16.mxu0 0
        %1222 = vmatpush2.bf16.msra.mxu0 0
        %1223 = vmatprep.mubr.bf16.mxu0 0
        %1224 = vmatmul.mubr.bf16.gmra.mxu0 %v779
        %v1225 = vpop.f32.mrf.mxu0
        %v1226 = vadd.f32 0.0, %v1225
        %v1227 = vpop.f32.mrf.mxu0
        %v1228 = vpop.f32.mrf.mxu0
        %v1229 = vadd.f32 0.0, %v1228
        %v1230 = vpop.f32.mrf.mxu0
        %1231 = vmatprep.mubr.bf16.mxu0 0
        %1232 = vmatmul.mubr.bf16.gmra.mxu0 %v780
        %v1233 = vpop.f32.mrf.mxu0
        %v1234 = vadd.f32 0.0, %v1233
        %v1235 = vpop.f32.mrf.mxu0
        %v1236 = vpop.f32.mrf.mxu0
        %v1237 = vadd.f32 0.0, %v1236
        %v1238 = vpop.f32.mrf.mxu0
        %1239 = vdwg.mxu0
        %v1240 = vadd.f32 %v1122, %v1226
        %v1241 = vadd.f32 %v1123, %v1229
        %v1242 = vadd.f32 %v1124, %v1234
        %v1243 = vadd.f32 %v1125, %v1237
        %v1244 = vld [vmem:[%s6] sm:$0x1]
        %v1246 = vlaneseq
        %v1247 = vshrl.u32 %v1246, 7
        %v1248 = vsub.s32 0, %v1247
        %v1249 = vrot.slane %v1244, %v1248
        %v1251 = vadd.f32 %v1240, %v1249
        %v1252 = vadd.f32 %v1241, %v1249
        %v1253 = vadd.f32 %v1242, %v1249
        %v1254 = vadd.f32 %v1243, %v1249
        %vm1255 = vcmp.gt.f32.partialorder %v1251, 0.0
        %vm1256 = vcmp.gt.f32.partialorder %v1252, 0.0
        %vm1257 = vcmp.gt.f32.partialorder %v1253, 0.0
        %vm1258 = vcmp.gt.f32.partialorder %v1254, 0.0
        %v1259 = vmul.f32 %v1251, 0.2
        %v1260 = vmul.f32 %v1252, 0.2
        %v1261 = vmul.f32 %v1253, 0.2
        %v1262 = vmul.f32 %v1254, 0.2
        %v1263 = vsel %vm1255, %v1251, %v1259
        %v1264 = vsel %vm1256, %v1252, %v1260
        %v1265 = vsel %vm1257, %v1253, %v1261
        %v1266 = vsel %vm1258, %v1254, %v1262
        %v1267 = vpack.c.bf16 %v1264, %v1263
        %v1268 = vpack.c.bf16 %v1266, %v1265
        %v1269 = vld [vmem:[%s7] sm:$0xf]
        %v1270 = vld [vmem:[%s7 + $0x4] sm:$0xf]
        %v1271 = vld [vmem:[%s7 + $0x8] sm:$0xf]
        %v1272 = vld [vmem:[%s7 + $0xc] sm:$0xf]
        %v1273 = vld [vmem:[%s7 + $0x10] sm:$0xf]
        %v1274 = vld [vmem:[%s7 + $0x14] sm:$0xf]
        %v1275 = vld [vmem:[%s7 + $0x18] sm:$0xf]
        %v1276 = vld [vmem:[%s7 + $0x1c] sm:$0xf]
        %v1277 = vld [vmem:[%s7 + $0x20] sm:$0xf]
        %v1278 = vld [vmem:[%s7 + $0x24] sm:$0xf]
        %v1279 = vld [vmem:[%s7 + $0x28] sm:$0xf]
        %v1280 = vld [vmem:[%s7 + $0x2c] sm:$0xf]
        %v1281 = vld [vmem:[%s7 + $0x30] sm:$0xf]
        %v1282 = vld [vmem:[%s7 + $0x34] sm:$0xf]
        %v1283 = vld [vmem:[%s7 + $0x38] sm:$0xf]
        %v1284 = vld [vmem:[%s7 + $0x3c] sm:$0xf]
        %v1285 = vld [vmem:[%s8] sm:$0x1]
        %v1287 = vlaneseq
        %v1288 = vshrl.u32 %v1287, 7
        %v1289 = vsub.s32 0, %v1288
        %v1290 = vrot.slane %v1285, %v1289
        %v1308 = vunpack.c.l.b16 %v1269
        %v1309 = vunpack.c.l.b16 %v1270
        %v1310 = vunpack.c.l.b16 %v1271
        %v1311 = vunpack.c.l.b16 %v1272
        %v1312 = vunpack.c.l.b16 %v1273
        %v1313 = vunpack.c.l.b16 %v1274
        %v1314 = vunpack.c.l.b16 %v1275
        %v1315 = vunpack.c.l.b16 %v1276
        %v1316 = vunpack.c.l.b16 %v1277
        %v1317 = vunpack.c.l.b16 %v1278
        %v1318 = vunpack.c.l.b16 %v1279
        %v1319 = vunpack.c.l.b16 %v1280
        %v1320 = vunpack.c.l.b16 %v1281
        %v1321 = vunpack.c.l.b16 %v1282
        %v1322 = vunpack.c.l.b16 %v1283
        %v1323 = vunpack.c.l.b16 %v1284
        %v1324 = vpack.c.b16 %v1309, %v1308
        %v1325 = vpack.c.b16 %v1311, %v1310
        %v1326 = vpack.c.b16 %v1313, %v1312
        %v1327 = vpack.c.b16 %v1315, %v1314
        %v1328 = vpack.c.b16 %v1317, %v1316
        %v1329 = vpack.c.b16 %v1319, %v1318
        %v1330 = vpack.c.b16 %v1321, %v1320
        %v1331 = vpack.c.b16 %v1323, %v1322
        %1340 = vmatprep.subr.bf16.mxu0 0
        %1341 = vmatpush1.bf16.msra.mxu0 %v1331
        %1342 = vmatprep.subr.bf16.mxu0 0
        %1343 = vmatpush1.bf16.msra.mxu0 %v1330
        %1344 = vmatprep.subr.bf16.mxu0 0
        %1345 = vmatpush1.bf16.msra.mxu0 %v1329
        %1346 = vmatprep.subr.bf16.mxu0 0
        %1347 = vmatpush1.bf16.msra.mxu0 %v1328
        %1348 = vmatprep.subr.bf16.mxu0 0
        %1349 = vmatpush1.bf16.msra.mxu0 %v1327
        %1350 = vmatprep.subr.bf16.mxu0 0
        %1351 = vmatpush1.bf16.msra.mxu0 %v1326
        %1352 = vmatprep.subr.bf16.mxu0 0
        %1353 = vmatpush1.bf16.msra.mxu0 %v1325
        %1354 = vmatprep.subr.bf16.mxu0 0
        %1355 = vmatpush1.bf16.msra.mxu0 %v1324
        %1356 = vmatprep.subr.bf16.mxu0 0
        %1357 = vmatpush2.bf16.msra.mxu0 0
        %1358 = vmatprep.subr.bf16.mxu0 0
        %1359 = vmatpush2.bf16.msra.mxu0 0
        %1360 = vmatprep.subr.bf16.mxu0 0
        %1361 = vmatpush2.bf16.msra.mxu0 0
        %1362 = vmatprep.subr.bf16.mxu0 0
        %1363 = vmatpush2.bf16.msra.mxu0 0
        %1364 = vmatprep.subr.bf16.mxu0 0
        %1365 = vmatpush2.bf16.msra.mxu0 0
        %1366 = vmatprep.subr.bf16.mxu0 0
        %1367 = vmatpush2.bf16.msra.mxu0 0
        %1368 = vmatprep.subr.bf16.mxu0 0
        %1369 = vmatpush2.bf16.msra.mxu0 0
        %1370 = vmatprep.subr.bf16.mxu0 0
        %1371 = vmatpush2.bf16.msra.mxu0 0
        %1372 = vmatprep.mubr.bf16.mxu0 0
        %1373 = vmatmul.mubr.bf16.gmra.mxu0 %v1267
        %v1374 = vpop.f32.mrf.mxu0
        %v1375 = vadd.f32 %v1290, %v1374
        %v1376 = vpop.f32.mrf.mxu0
        %v1377 = vpop.f32.mrf.mxu0
        %v1378 = vadd.f32 %v1290, %v1377
        %v1379 = vpop.f32.mrf.mxu0
        %1380 = vmatprep.mubr.bf16.mxu0 0
        %1381 = vmatmul.mubr.bf16.gmra.mxu0 %v1268
        %v1382 = vpop.f32.mrf.mxu0
        %v1383 = vadd.f32 %v1290, %v1382
        %v1384 = vpop.f32.mrf.mxu0
        %v1385 = vpop.f32.mrf.mxu0
        %v1386 = vadd.f32 %v1290, %v1385
        %v1387 = vpop.f32.mrf.mxu0
        %1388 = vdwg.mxu0
        %1389 = vst [vmem:[%s326] sm:$0xff] %v1375
        %1390 = vst [vmem:[%s326 + $0x8] sm:$0xff] %v1378
        %1391 = vst [vmem:[%s326 + $0x10] sm:$0xff] %v1383
        %1392 = vst [vmem:[%s326 + $0x18] sm:$0xff] %v1386
        %s1393 = sand.u32 %s225, 1
        %s1394 = scalar_lea.sflag [#allocation3], %s1393
        %s1395 = sand.u32 %s225, 1
        %s1396 = smul.addr %s1395, 32
        %s1397 = scalar_lea.vmem [#allocation2], %s1396
        // Predicated region
        $region57: #{_lambda_.1} parent=55 // pred_check
          %p1398 = pneg %p235
        $region58: #{_lambda_.1} parent=55 // pred_check_branch
          %1400 = sbr.rel (%p1398) target = $region60
        $region59: #{_lambda_.1} parent=55 // pred_region
          %s1401 = smul.u32 4, %s23
          %s1403 = ssub.s32 512, 512
          %1404 = vsyncadd %s1394, %s1403
          %s1405 = smul.addr %s1401, 128
          %s1406 = scalar_lea.hbm %s9, %s1405
          %s1407 = sshll.u32 %s1397, 4
          %s1408 = int_to_ptr.vmem [resolvable:$true] %s1407
          %1413 = dma.vmem_to_hbm [thread:$0]  %s1408, 512, %s1406, %s1394, 128, 128, 8
        $region60: #{_lambda_.1} parent=55 // pred_fallthru
          _
      $region56: #{_lambda_.1} parent=5 // pred_fallthru
        _
      %p1414 = scmp.le.s32.totalorder 2, %s18
      // Predicated region
      $region61: #{_lambda_.1} parent=5 // pred_check
        %p1415 = pneg %p1414
      $region62: #{_lambda_.1} parent=5 // pred_check_branch
        %1417 = sbr.rel (%p1415) target = $region64
      $region63: #{_lambda_.1} parent=5 // pred_region
        %s1418 = ssub.s32 %s18, 2
        // Predicated region
        $region65: #{_lambda_.1} parent=63 // pred_check
          %p1419 = pneg %p241
        $region66: #{_lambda_.1} parent=63 // pred_check_branch
          %1421 = sbr.rel (%p1419) target = $region68
        $region67: #{_lambda_.1} parent=63 // pred_region
          %s1422 = sand.u32 %s226, 1
          %s1423 = scalar_lea.sflag [#allocation3], %s1422
          %s1424 = sand.u32 %s226, 1
          %s1425 = smul.addr %s1424, 32
          %s1426 = scalar_lea.vmem [#allocation2], %s1425
          %1427 = dma.done %s1423, 512
        $region68: #{_lambda_.1} parent=63 // pred_fallthru
          _
      $region64: #{_lambda_.1} parent=5 // pred_fallthru
        _
    $region6: #{_lambda_.1} parent=1 // loop_footer
      %s22 = sadd.s32 1, %s18
    $region7: #{_lambda_.1} parent=1 // loop_footer_branch
      %17 = sbr.rel target = $region3
    $region8: #{_lambda_.1} parent=1 // loop_exit
      _
    %1428 = vsyncpa [#allocation3], 1
    %s1429 = scalar_lea.sflag [#allocation3], 1
    %1430 = vsyncpa %s1429, 1

</llo_original>
